<compile_context>
chip_gen: v5e
topology: v5e:2x2
jax: 0.10.0
libtpu: 0.0.40
codegen_flags: <defaults>
</compile_context>

<pallas_src>
import functools

import jax
import jax.numpy as jnp
from jax import lax
from jax.experimental import pallas as pl
from jax.experimental.pallas import tpu as pltpu

EMB_DIM = 50
EMB_PAD = 128        # lane-aligned padded embedding dim used inside the kernel
HIDDEN = 64          # GRU hidden size (matches the PyTorch module)
HIDDEN_PAD = 128     # lane-aligned padded hidden size used inside the kernel
MAX_VAL = 100


def _count_gru_loss_kernel(emb_ref, y_ref, mask_ref, wih_ref, whh_ref,
                           bih_ref, bhn_ref, wfc_ref, bfc_ref,
                           loss_ref, gi_sc, h_sc,
                           *, seq_len, batch_pad, n_valid):
    """Fused GRU recurrence + Linear + MSE.

    emb_ref: (T*BP, EP)     time-major, batch-padded, lane-dense embedded inputs
    y_ref:   (T*BP, 1)      regression targets (pad rows arbitrary, masked out)
    mask_ref:(T*BP, 1)      1.0 for valid rows, 0.0 for batch-pad rows
    wih_ref: (EP, 3*HP)     gate blocks [r | z | n], lane-aligned, zero-padded
    whh_ref: (HP, 3*HP)     padded likewise (rows >= H are zero)
    bih_ref: (1, 3*HP)      b_ih with b_hr/b_hz pre-folded into r/z blocks
    bhn_ref: (1, HP)        b_hn only (must stay inside the r*(...) term)
    wfc_ref: (1, HP)        fc weight row (cols >= H zero)
    bfc_ref: (1, 1)         fc bias
    loss_ref:(1, 1) SMEM    scalar MSE loss output
    gi_sc:   (T*BP, 3*HP)   VMEM scratch — hoisted input-gate projections
    h_sc:    (T*BP, HP)     VMEM scratch — per-step hidden states
    """
    HP = whh_ref.shape[0]

    # (1) Hoisted input projection: one batched MXU matmul, biases folded in.
    gi_sc[...] = (
        jnp.dot(emb_ref[...], wih_ref[...], preferred_element_type=jnp.float32)
        + bih_ref[...])

    # (2) Hoisted recurrent weight load / b_hn broadcast (not per-step).
    whh = whh_ref[...]
    bhn = jnp.broadcast_to(bhn_ref[...], (batch_pad, HP))

    # (3) Fully unrolled recurrence over time (seq_len is small and static).
    #     Row offsets are static multiples of BP=8 -> full-tile, unmasked
    #     sublane accesses on gi_sc / h_sc.
    h = jnp.zeros((batch_pad, HP), jnp.float32)
    for t in range(seq_len):
        row = t * batch_pad
        gi = gi_sc[pl.ds(row, batch_pad), :]                            # (BP, 3*HP)
        gh = jnp.dot(h, whh, preferred_element_type=jnp.float32)        # (BP, 3*HP)
        # Gate slices are 128-lane aligned blocks: [0:HP]=r, [HP:2HP]=z, [2HP:]=n.
        r = jax.nn.sigmoid(gi[:, 0:HP] + gh[:, 0:HP])
        z = jax.nn.sigmoid(gi[:, HP:2 * HP] + gh[:, HP:2 * HP])
        n = jnp.tanh(gi[:, 2 * HP:] + r * (gh[:, 2 * HP:] + bhn))
        h = (1.0 - z) * n + z * h
        h_sc[pl.ds(row, batch_pad), :] = h

    # (4) fc + MSE once, on the lane-dense (T*BP, HP) slab — VPU mul + reduce
    #     instead of an N=1 MXU matmul inside the serial loop.  Pad-batch rows
    #     are zeroed by the mask before squaring.
    out = jnp.sum(h_sc[...] * wfc_ref[...], axis=-1, keepdims=True)     # (T*BP, 1)
    err = (out + bfc_ref[...] - y_ref[...]) * mask_ref[...]
    loss_ref[0, 0] = jnp.sum(err * err) / jnp.float32(n_valid)


def pack_params(params):
    """One-time padding / packing of weights into the kernel's lane-aligned layout.

    Called ONCE outside the per-call path (perf review: no per-call pad/scatter).
    """
    H, HP, E, EP = HIDDEN, HIDDEN_PAD, EMB_DIM, EMB_PAD

    wih_p = jnp.zeros((EP, 3 * HP), jnp.float32)
    whh_p = jnp.zeros((HP, 3 * HP), jnp.float32)
    for g in range(3):
        wih_p = wih_p.at[:E, g * HP:g * HP + H].set(params["wih_t"][:, g * H:(g + 1) * H])
        whh_p = whh_p.at[:H, g * HP:g * HP + H].set(params["whh_t"][:, g * H:(g + 1) * H])

    # Fold b_hr, b_hz into the hoisted bias; b_hn stays separate (inside r*(...)).
    bih_fold = jnp.zeros((1, 3 * HP), jnp.float32)
    bih_fold = bih_fold.at[0, 0:H].set(params["bih"][0, 0:H] + params["bhh"][0, 0:H])
    bih_fold = bih_fold.at[0, HP:HP + H].set(
        params["bih"][0, H:2 * H] + params["bhh"][0, H:2 * H])
    bih_fold = bih_fold.at[0, 2 * HP:2 * HP + H].set(params["bih"][0, 2 * H:3 * H])
    bhn_p = jnp.zeros((1, HP), jnp.float32).at[0, :H].set(params["bhh"][0, 2 * H:3 * H])

    wfc_p = jnp.zeros((1, HP), jnp.float32).at[0, :H].set(params["wfc_t"][:, 0])
    emb_table_p = jnp.zeros((MAX_VAL, EP), jnp.float32).at[:, :E].set(
        params["emb_table"].astype(jnp.float32))

    return {
        "emb_table_p": emb_table_p,   # (MAX_VAL, EP) lane-dense embedding table
        "wih_p": wih_p,               # (EP, 3*HP)
        "whh_p": whh_p,               # (HP, 3*HP)
        "bih_fold_p": bih_fold,       # (1, 3*HP)
        "bhn_p": bhn_p,               # (1, HP)
        "wfc_p": wfc_p,               # (1, HP)
        "bfc": params["bfc"].astype(jnp.float32),   # (1, 1)
    }


@jax.jit
def count_model_loss(x_idx, y, packed):
    """x_idx: (B, T) int32 indices in [0, MAX_VAL); y: (B, T, 1) float. Returns scalar MSE."""
    B, T = x_idx.shape
    BP = max(8, ((B + 7) // 8) * 8)   # batch padded to a full sublane tile

    # TODO(synk): embedding gather stays in the JAX wrapper (an in-kernel gather
    # would need manual per-row DMA). The transpose is folded into the gather;
    # the table is already lane-padded so the slab is lane-dense.
    emb = packed["emb_table_p"][x_idx.T]                               # (T, B, EP)
    emb_flat = jnp.pad(emb, ((0, 0), (0, BP - B), (0, 0))).reshape(T * BP, EMB_PAD)

    y_t = jnp.transpose(y.astype(jnp.float32), (1, 0, 2))              # (T, B, 1)
    y_flat = jnp.pad(y_t, ((0, 0), (0, BP - B), (0, 0))).reshape(T * BP, 1)

    # Row-validity mask for the padded batch rows (constant at trace time).
    row_valid = (jnp.arange(BP) < B).astype(jnp.float32)               # (BP,)
    mask_flat = jnp.broadcast_to(row_valid[None, :], (T, BP)).reshape(T * BP, 1)

    kernel = functools.partial(_count_gru_loss_kernel,
                               seq_len=T, batch_pad=BP, n_valid=B * T)
    vmem = pl.BlockSpec(memory_space=pltpu.MemorySpace.VMEM)
    smem = pl.BlockSpec(memory_space=pltpu.MemorySpace.SMEM)

    loss = pl.pallas_call(
        kernel,
        out_shape=jax.ShapeDtypeStruct((1, 1), jnp.float32),
        in_specs=[vmem] * 9,
        out_specs=smem,
        scratch_shapes=[
            pltpu.VMEM((T * BP, 3 * HIDDEN_PAD), jnp.float32),   # gi_sc
            pltpu.VMEM((T * BP, HIDDEN_PAD), jnp.float32),       # h_sc
        ],
    )(emb_flat, y_flat, mask_flat,
      packed["wih_p"], packed["whh_p"], packed["bih_fold_p"], packed["bhn_p"],
      packed["wfc_p"], packed["bfc"])
    return loss[0, 0]


def init_params(key):
    """Deterministic synthetic parameters matching CountModel's shapes."""
    k_emb, k_wih, k_whh, k_bih, k_bhh, k_wfc, k_bfc = jax.random.split(key, 7)
    k = 1.0 / jnp.sqrt(jnp.float32(HIDDEN))
    return {
        # Embedding(num_embeddings=100, embedding_dim=50): N(0,1) like PyTorch.
        "emb_table": jax.random.normal(k_emb, (MAX_VAL, EMB_DIM), jnp.float32),
        # GRU weight_ih_l0 is (3H, E) in PyTorch; we store its transpose (E, 3H).
        "wih_t": jax.random.uniform(k_wih, (EMB_DIM, 3 * HIDDEN), jnp.float32, -k, k),
        # GRU weight_hh_l0 is (3H, H); transpose (H, 3H).
        "whh_t": jax.random.uniform(k_whh, (HIDDEN, 3 * HIDDEN), jnp.float32, -k, k),
        "bih": jax.random.uniform(k_bih, (1, 3 * HIDDEN), jnp.float32, -k, k),
        "bhh": jax.random.uniform(k_bhh, (1, 3 * HIDDEN), jnp.float32, -k, k),
        # Linear(64, 1): weight (1, 64) -> transpose (64, 1); bias (1,) -> (1, 1).
        "wfc_t": jax.random.uniform(k_wfc, (HIDDEN, 1), jnp.float32, -k, k),
        "bfc": jax.random.uniform(k_bfc, (1, 1), jnp.float32, -k, k),
    }


def reference_loss(x_idx, y, params):
    """Pure-JAX reference (same GRU math as PyTorch, lax.scan over time, unpadded)."""
    emb = params["emb_table"][x_idx].astype(jnp.float32)          # (B, T, E)
    emb_t = jnp.transpose(emb, (1, 0, 2))                         # (T, B, E)
    y_t = jnp.transpose(y.astype(jnp.float32), (1, 0, 2))         # (T, B, 1)
    B = emb.shape[0]
    H = HIDDEN

    def step(h, inp):
        x_t, y_s = inp
        gi = x_t @ params["wih_t"] + params["bih"]
        gh = h @ params["whh_t"] + params["bhh"]
        r = jax.nn.sigmoid(gi[:, :H] + gh[:, :H])
        z = jax.nn.sigmoid(gi[:, H:2 * H] + gh[:, H:2 * H])
        n = jnp.tanh(gi[:, 2 * H:] + r * gh[:, 2 * H:])
        h_new = (1.0 - z) * n + z * h
        out = h_new @ params["wfc_t"] + params["bfc"]
        return h_new, jnp.sum((out - y_s) ** 2)

    _, sq = lax.scan(step, jnp.zeros((B, H), jnp.float32), (emb_t, y_t))
    return jnp.sum(sq) / jnp.float32(y.size)


if __name__ == "__main__":
    key = jax.random.PRNGKey(0)
    k_params, k_x, k_y = jax.random.split(key, 3)

    B, T = 2, 8
    params = init_params(k_params)
    packed = pack_params(params)          # one-time padding/packing (not per-call)
    jax.block_until_ready(packed)

    x_idx = jax.random.randint(k_x, (B, T), 0, MAX_VAL, jnp.int32)
    # Targets: per-step regression values, shape (B, T, 1).
    y = jax.random.uniform(k_y, (B, T, 1), jnp.float32, 0.0, 10.0)

    loss = count_model_loss(x_idx, y, packed)
    jax.block_until_ready(loss)

    ref = reference_loss(x_idx, y, params)
    assert jnp.allclose(loss, ref, rtol=1e-4, atol=1e-4), (loss, ref)

    print("KERNEL_OK")
</pallas_src>

<mosaic_0001>
module attributes {stable_mosaic.version = 11 : i64} {
  func.func @_count_gru_loss_kernel(%arg0: memref<64x128xf32, #tpu.memory_space<vmem>>, %arg1: memref<64x1xf32, #tpu.memory_space<vmem>>, %arg2: memref<64x1xf32, #tpu.memory_space<vmem>>, %arg3: memref<128x384xf32, #tpu.memory_space<vmem>>, %arg4: memref<128x384xf32, #tpu.memory_space<vmem>>, %arg5: memref<1x384xf32, #tpu.memory_space<vmem>>, %arg6: memref<1x128xf32, #tpu.memory_space<vmem>>, %arg7: memref<1x128xf32, #tpu.memory_space<vmem>>, %arg8: memref<1x1xf32, #tpu.memory_space<vmem>>, %arg9: memref<1x1xf32, #tpu.memory_space<smem>>, %arg10: memref<64x384xf32, #tpu.memory_space<vmem>>, %arg11: memref<64x128xf32, #tpu.memory_space<vmem>>) attributes {dimension_semantics = [], scalar_prefetch = 0 : i64, scratch_operands = 2 : i64, tpu.core_type = #tpu.core_type<tc>} {
    %c0 = arith.constant 0 : index
    %c0_0 = arith.constant 0 : index
    %0 = vector.load %arg0[%c0, %c0_0] : memref<64x128xf32, #tpu.memory_space<vmem>>, vector<64x128xf32>
    %c0_1 = arith.constant 0 : index
    %c0_2 = arith.constant 0 : index
    %1 = vector.load %arg3[%c0_1, %c0_2] : memref<128x384xf32, #tpu.memory_space<vmem>>, vector<128x384xf32>
    %cst = arith.constant dense<0.000000e+00> : vector<64x384xf32>
    %2 = tpu.matmul %0, %1, %cst {dimension_numbers = #tpu.dot_dimension_numbers<[1], [0], [0], [1], [0, 0, 1, 1], [], []>} : vector<64x128xf32>, vector<128x384xf32>, vector<64x384xf32> -> vector<64x384xf32>
    %c0_3 = arith.constant 0 : index
    %c0_4 = arith.constant 0 : index
    %3 = vector.load %arg5[%c0_3, %c0_4] : memref<1x384xf32, #tpu.memory_space<vmem>>, vector<1x384xf32>
    %4 = vector.broadcast %3 : vector<1x384xf32> to vector<64x384xf32>
    %5 = arith.addf %2, %4 : vector<64x384xf32>
    %c0_5 = arith.constant 0 : index
    %c0_6 = arith.constant 0 : index
    %6 = vector.load %arg10[%c0_5, %c0_6] : memref<64x384xf32, #tpu.memory_space<vmem>>, vector<64x384xf32>
    tpu.vector_store %arg10[%c0_5, %c0_6], %5 {strides = array<i32>} : memref<64x384xf32, #tpu.memory_space<vmem>>, vector<64x384xf32>,
    %c0_7 = arith.constant 0 : index
    %c0_8 = arith.constant 0 : index
    %7 = vector.load %arg4[%c0_7, %c0_8] : memref<128x384xf32, #tpu.memory_space<vmem>>, vector<128x384xf32>
    %c0_9 = arith.constant 0 : index
    %c0_10 = arith.constant 0 : index
    %8 = vector.load %arg6[%c0_9, %c0_10] : memref<1x128xf32, #tpu.memory_space<vmem>>, vector<1x128xf32>
    %9 = vector.shape_cast %8 : vector<1x128xf32> to vector<1x128xf32>
    %10 = vector.broadcast %9 : vector<1x128xf32> to vector<8x128xf32>
    %cst_11 = arith.constant 0.000000e+00 : f32
    %11 = vector.broadcast %cst_11 : f32 to vector<8x128xf32>
    %c0_12 = arith.constant 0 : index
    %c0_13 = arith.constant 0 : index
    %12 = vector.load %arg10[%c0_12, %c0_13] : memref<64x384xf32, #tpu.memory_space<vmem>>, vector<8x384xf32>
    %cst_14 = arith.constant dense<0.000000e+00> : vector<8x384xf32>
    %13 = tpu.matmul %11, %7, %cst_14 {dimension_numbers = #tpu.dot_dimension_numbers<[1], [0], [0], [1], [0, 0, 1, 1], [], []>} : vector<8x128xf32>, vector<128x384xf32>, vector<8x384xf32> -> vector<8x384xf32>
    %14 = vector.extract_strided_slice %12 {offsets = [0, 0], sizes = [8, 128], strides = [1, 1]} : vector<8x384xf32> to vector<8x128xf32>
    %15 = vector.extract_strided_slice %13 {offsets = [0, 0], sizes = [8, 128], strides = [1, 1]} : vector<8x384xf32> to vector<8x128xf32>
    %16 = arith.addf %14, %15 : vector<8x128xf32>
    %17 = arith.negf %16 : vector<8x128xf32>
    %18 = math.exp %17 : vector<8x128xf32>
    %cst_15 = arith.constant 1.000000e+00 : f32
    %19 = vector.broadcast %cst_15 : f32 to vector<8x128xf32>
    %20 = arith.addf %19, %18 : vector<8x128xf32>
    %21 = arith.divf %19, %20 : vector<8x128xf32>
    %22 = vector.extract_strided_slice %12 {offsets = [0, 128], sizes = [8, 128], strides = [1, 1]} : vector<8x384xf32> to vector<8x128xf32>
    %23 = vector.extract_strided_slice %13 {offsets = [0, 128], sizes = [8, 128], strides = [1, 1]} : vector<8x384xf32> to vector<8x128xf32>
    %24 = arith.addf %22, %23 : vector<8x128xf32>
    %25 = arith.negf %24 : vector<8x128xf32>
    %26 = math.exp %25 : vector<8x128xf32>
    %cst_16 = arith.constant 1.000000e+00 : f32
    %27 = vector.broadcast %cst_16 : f32 to vector<8x128xf32>
    %28 = arith.addf %27, %26 : vector<8x128xf32>
    %29 = arith.divf %27, %28 : vector<8x128xf32>
    %30 = vector.extract_strided_slice %12 {offsets = [0, 256], sizes = [8, 128], strides = [1, 1]} : vector<8x384xf32> to vector<8x128xf32>
    %31 = vector.extract_strided_slice %13 {offsets = [0, 256], sizes = [8, 128], strides = [1, 1]} : vector<8x384xf32> to vector<8x128xf32>
    %32 = arith.addf %31, %10 : vector<8x128xf32>
    %33 = arith.mulf %21, %32 : vector<8x128xf32>
    %34 = arith.addf %30, %33 : vector<8x128xf32>
    %35 = math.tanh %34 : vector<8x128xf32>
    %cst_17 = arith.constant 1.000000e+00 : f32
    %36 = vector.broadcast %cst_17 : f32 to vector<8x128xf32>
    %37 = arith.subf %36, %29 : vector<8x128xf32>
    %38 = arith.mulf %37, %35 : vector<8x128xf32>
    %39 = arith.mulf %29, %11 : vector<8x128xf32>
    %40 = arith.addf %38, %39 : vector<8x128xf32>
    %c0_18 = arith.constant 0 : index
    %c0_19 = arith.constant 0 : index
    %41 = vector.load %arg11[%c0_18, %c0_19] : memref<64x128xf32, #tpu.memory_space<vmem>>, vector<8x128xf32>
    tpu.vector_store %arg11[%c0_18, %c0_19], %40 {strides = array<i32>} : memref<64x128xf32, #tpu.memory_space<vmem>>, vector<8x128xf32>,
    %c8 = arith.constant 8 : index
    %c0_20 = arith.constant 0 : index
    %42 = vector.load %arg10[%c8, %c0_20] : memref<64x384xf32, #tpu.memory_space<vmem>>, vector<8x384xf32>
    %cst_21 = arith.constant dense<0.000000e+00> : vector<8x384xf32>
    %43 = tpu.matmul %40, %7, %cst_21 {dimension_numbers = #tpu.dot_dimension_numbers<[1], [0], [0], [1], [0, 0, 1, 1], [], []>} : vector<8x128xf32>, vector<128x384xf32>, vector<8x384xf32> -> vector<8x384xf32>
    %44 = vector.extract_strided_slice %42 {offsets = [0, 0], sizes = [8, 128], strides = [1, 1]} : vector<8x384xf32> to vector<8x128xf32>
    %45 = vector.extract_strided_slice %43 {offsets = [0, 0], sizes = [8, 128], strides = [1, 1]} : vector<8x384xf32> to vector<8x128xf32>
    %46 = arith.addf %44, %45 : vector<8x128xf32>
    %47 = arith.negf %46 : vector<8x128xf32>
    %48 = math.exp %47 : vector<8x128xf32>
    %cst_22 = arith.constant 1.000000e+00 : f32
    %49 = vector.broadcast %cst_22 : f32 to vector<8x128xf32>
    %50 = arith.addf %49, %48 : vector<8x128xf32>
    %51 = arith.divf %49, %50 : vector<8x128xf32>
    %52 = vector.extract_strided_slice %42 {offsets = [0, 128], sizes = [8, 128], strides = [1, 1]} : vector<8x384xf32> to vector<8x128xf32>
    %53 = vector.extract_strided_slice %43 {offsets = [0, 128], sizes = [8, 128], strides = [1, 1]} : vector<8x384xf32> to vector<8x128xf32>
    %54 = arith.addf %52, %53 : vector<8x128xf32>
    %55 = arith.negf %54 : vector<8x128xf32>
    %56 = math.exp %55 : vector<8x128xf32>
    %cst_23 = arith.constant 1.000000e+00 : f32
    %57 = vector.broadcast %cst_23 : f32 to vector<8x128xf32>
    %58 = arith.addf %57, %56 : vector<8x128xf32>
    %59 = arith.divf %57, %58 : vector<8x128xf32>
    %60 = vector.extract_strided_slice %42 {offsets = [0, 256], sizes = [8, 128], strides = [1, 1]} : vector<8x384xf32> to vector<8x128xf32>
    %61 = vector.extract_strided_slice %43 {offsets = [0, 256], sizes = [8, 128], strides = [1, 1]} : vector<8x384xf32> to vector<8x128xf32>
    %62 = arith.addf %61, %10 : vector<8x128xf32>
    %63 = arith.mulf %51, %62 : vector<8x128xf32>
    %64 = arith.addf %60, %63 : vector<8x128xf32>
    %65 = math.tanh %64 : vector<8x128xf32>
    %cst_24 = arith.constant 1.000000e+00 : f32
    %66 = vector.broadcast %cst_24 : f32 to vector<8x128xf32>
    %67 = arith.subf %66, %59 : vector<8x128xf32>
    %68 = arith.mulf %67, %65 : vector<8x128xf32>
    %69 = arith.mulf %59, %40 : vector<8x128xf32>
    %70 = arith.addf %68, %69 : vector<8x128xf32>
    %c8_25 = arith.constant 8 : index
    %c0_26 = arith.constant 0 : index
    %71 = vector.load %arg11[%c8_25, %c0_26] : memref<64x128xf32, #tpu.memory_space<vmem>>, vector<8x128xf32>
    tpu.vector_store %arg11[%c8_25, %c0_26], %70 {strides = array<i32>} : memref<64x128xf32, #tpu.memory_space<vmem>>, vector<8x128xf32>,
    %c16 = arith.constant 16 : index
    %c0_27 = arith.constant 0 : index
    %72 = vector.load %arg10[%c16, %c0_27] : memref<64x384xf32, #tpu.memory_space<vmem>>, vector<8x384xf32>
    %cst_28 = arith.constant dense<0.000000e+00> : vector<8x384xf32>
    %73 = tpu.matmul %70, %7, %cst_28 {dimension_numbers = #tpu.dot_dimension_numbers<[1], [0], [0], [1], [0, 0, 1, 1], [], []>} : vector<8x128xf32>, vector<128x384xf32>, vector<8x384xf32> -> vector<8x384xf32>
    %74 = vector.extract_strided_slice %72 {offsets = [0, 0], sizes = [8, 128], strides = [1, 1]} : vector<8x384xf32> to vector<8x128xf32>
    %75 = vector.extract_strided_slice %73 {offsets = [0, 0], sizes = [8, 128], strides = [1, 1]} : vector<8x384xf32> to vector<8x128xf32>
    %76 = arith.addf %74, %75 : vector<8x128xf32>
    %77 = arith.negf %76 : vector<8x128xf32>
    %78 = math.exp %77 : vector<8x128xf32>
    %cst_29 = arith.constant 1.000000e+00 : f32
    %79 = vector.broadcast %cst_29 : f32 to vector<8x128xf32>
    %80 = arith.addf %79, %78 : vector<8x128xf32>
    %81 = arith.divf %79, %80 : vector<8x128xf32>
    %82 = vector.extract_strided_slice %72 {offsets = [0, 128], sizes = [8, 128], strides = [1, 1]} : vector<8x384xf32> to vector<8x128xf32>
    %83 = vector.extract_strided_slice %73 {offsets = [0, 128], sizes = [8, 128], strides = [1, 1]} : vector<8x384xf32> to vector<8x128xf32>
    %84 = arith.addf %82, %83 : vector<8x128xf32>
    %85 = arith.negf %84 : vector<8x128xf32>
    %86 = math.exp %85 : vector<8x128xf32>
    %cst_30 = arith.constant 1.000000e+00 : f32
    %87 = vector.broadcast %cst_30 : f32 to vector<8x128xf32>
    %88 = arith.addf %87, %86 : vector<8x128xf32>
    %89 = arith.divf %87, %88 : vector<8x128xf32>
    %90 = vector.extract_strided_slice %72 {offsets = [0, 256], sizes = [8, 128], strides = [1, 1]} : vector<8x384xf32> to vector<8x128xf32>
    %91 = vector.extract_strided_slice %73 {offsets = [0, 256], sizes = [8, 128], strides = [1, 1]} : vector<8x384xf32> to vector<8x128xf32>
    %92 = arith.addf %91, %10 : vector<8x128xf32>
    %93 = arith.mulf %81, %92 : vector<8x128xf32>
    %94 = arith.addf %90, %93 : vector<8x128xf32>
    %95 = math.tanh %94 : vector<8x128xf32>
    %cst_31 = arith.constant 1.000000e+00 : f32
    %96 = vector.broadcast %cst_31 : f32 to vector<8x128xf32>
    %97 = arith.subf %96, %89 : vector<8x128xf32>
    %98 = arith.mulf %97, %95 : vector<8x128xf32>
    %99 = arith.mulf %89, %70 : vector<8x128xf32>
    %100 = arith.addf %98, %99 : vector<8x128xf32>
    %c16_32 = arith.constant 16 : index
    %c0_33 = arith.constant 0 : index
    %101 = vector.load %arg11[%c16_32, %c0_33] : memref<64x128xf32, #tpu.memory_space<vmem>>, vector<8x128xf32>
    tpu.vector_store %arg11[%c16_32, %c0_33], %100 {strides = array<i32>} : memref<64x128xf32, #tpu.memory_space<vmem>>, vector<8x128xf32>,
    %c24 = arith.constant 24 : index
    %c0_34 = arith.constant 0 : index
    %102 = vector.load %arg10[%c24, %c0_34] : memref<64x384xf32, #tpu.memory_space<vmem>>, vector<8x384xf32>
    %cst_35 = arith.constant dense<0.000000e+00> : vector<8x384xf32>
    %103 = tpu.matmul %100, %7, %cst_35 {dimension_numbers = #tpu.dot_dimension_numbers<[1], [0], [0], [1], [0, 0, 1, 1], [], []>} : vector<8x128xf32>, vector<128x384xf32>, vector<8x384xf32> -> vector<8x384xf32>
    %104 = vector.extract_strided_slice %102 {offsets = [0, 0], sizes = [8, 128], strides = [1, 1]} : vector<8x384xf32> to vector<8x128xf32>
    %105 = vector.extract_strided_slice %103 {offsets = [0, 0], sizes = [8, 128], strides = [1, 1]} : vector<8x384xf32> to vector<8x128xf32>
    %106 = arith.addf %104, %105 : vector<8x128xf32>
    %107 = arith.negf %106 : vector<8x128xf32>
    %108 = math.exp %107 : vector<8x128xf32>
    %cst_36 = arith.constant 1.000000e+00 : f32
    %109 = vector.broadcast %cst_36 : f32 to vector<8x128xf32>
    %110 = arith.addf %109, %108 : vector<8x128xf32>
    %111 = arith.divf %109, %110 : vector<8x128xf32>
    %112 = vector.extract_strided_slice %102 {offsets = [0, 128], sizes = [8, 128], strides = [1, 1]} : vector<8x384xf32> to vector<8x128xf32>
    %113 = vector.extract_strided_slice %103 {offsets = [0, 128], sizes = [8, 128], strides = [1, 1]} : vector<8x384xf32> to vector<8x128xf32>
    %114 = arith.addf %112, %113 : vector<8x128xf32>
    %115 = arith.negf %114 : vector<8x128xf32>
    %116 = math.exp %115 : vector<8x128xf32>
    %cst_37 = arith.constant 1.000000e+00 : f32
    %117 = vector.broadcast %cst_37 : f32 to vector<8x128xf32>
    %118 = arith.addf %117, %116 : vector<8x128xf32>
    %119 = arith.divf %117, %118 : vector<8x128xf32>
    %120 = vector.extract_strided_slice %102 {offsets = [0, 256], sizes = [8, 128], strides = [1, 1]} : vector<8x384xf32> to vector<8x128xf32>
    %121 = vector.extract_strided_slice %103 {offsets = [0, 256], sizes = [8, 128], strides = [1, 1]} : vector<8x384xf32> to vector<8x128xf32>
    %122 = arith.addf %121, %10 : vector<8x128xf32>
    %123 = arith.mulf %111, %122 : vector<8x128xf32>
    %124 = arith.addf %120, %123 : vector<8x128xf32>
    %125 = math.tanh %124 : vector<8x128xf32>
    %cst_38 = arith.constant 1.000000e+00 : f32
    %126 = vector.broadcast %cst_38 : f32 to vector<8x128xf32>
    %127 = arith.subf %126, %119 : vector<8x128xf32>
    %128 = arith.mulf %127, %125 : vector<8x128xf32>
    %129 = arith.mulf %119, %100 : vector<8x128xf32>
    %130 = arith.addf %128, %129 : vector<8x128xf32>
    %c24_39 = arith.constant 24 : index
    %c0_40 = arith.constant 0 : index
    %131 = vector.load %arg11[%c24_39, %c0_40] : memref<64x128xf32, #tpu.memory_space<vmem>>, vector<8x128xf32>
    tpu.vector_store %arg11[%c24_39, %c0_40], %130 {strides = array<i32>} : memref<64x128xf32, #tpu.memory_space<vmem>>, vector<8x128xf32>,
    %c32 = arith.constant 32 : index
    %c0_41 = arith.constant 0 : index
    %132 = vector.load %arg10[%c32, %c0_41] : memref<64x384xf32, #tpu.memory_space<vmem>>, vector<8x384xf32>
    %cst_42 = arith.constant dense<0.000000e+00> : vector<8x384xf32>
    %133 = tpu.matmul %130, %7, %cst_42 {dimension_numbers = #tpu.dot_dimension_numbers<[1], [0], [0], [1], [0, 0, 1, 1], [], []>} : vector<8x128xf32>, vector<128x384xf32>, vector<8x384xf32> -> vector<8x384xf32>
    %134 = vector.extract_strided_slice %132 {offsets = [0, 0], sizes = [8, 128], strides = [1, 1]} : vector<8x384xf32> to vector<8x128xf32>
    %135 = vector.extract_strided_slice %133 {offsets = [0, 0], sizes = [8, 128], strides = [1, 1]} : vector<8x384xf32> to vector<8x128xf32>
    %136 = arith.addf %134, %135 : vector<8x128xf32>
    %137 = arith.negf %136 : vector<8x128xf32>
    %138 = math.exp %137 : vector<8x128xf32>
    %cst_43 = arith.constant 1.000000e+00 : f32
    %139 = vector.broadcast %cst_43 : f32 to vector<8x128xf32>
    %140 = arith.addf %139, %138 : vector<8x128xf32>
    %141 = arith.divf %139, %140 : vector<8x128xf32>
    %142 = vector.extract_strided_slice %132 {offsets = [0, 128], sizes = [8, 128], strides = [1, 1]} : vector<8x384xf32> to vector<8x128xf32>
    %143 = vector.extract_strided_slice %133 {offsets = [0, 128], sizes = [8, 128], strides = [1, 1]} : vector<8x384xf32> to vector<8x128xf32>
    %144 = arith.addf %142, %143 : vector<8x128xf32>
    %145 = arith.negf %144 : vector<8x128xf32>
    %146 = math.exp %145 : vector<8x128xf32>
    %cst_44 = arith.constant 1.000000e+00 : f32
    %147 = vector.broadcast %cst_44 : f32 to vector<8x128xf32>
    %148 = arith.addf %147, %146 : vector<8x128xf32>
    %149 = arith.divf %147, %148 : vector<8x128xf32>
    %150 = vector.extract_strided_slice %132 {offsets = [0, 256], sizes = [8, 128], strides = [1, 1]} : vector<8x384xf32> to vector<8x128xf32>
    %151 = vector.extract_strided_slice %133 {offsets = [0, 256], sizes = [8, 128], strides = [1, 1]} : vector<8x384xf32> to vector<8x128xf32>
    %152 = arith.addf %151, %10 : vector<8x128xf32>
    %153 = arith.mulf %141, %152 : vector<8x128xf32>
    %154 = arith.addf %150, %153 : vector<8x128xf32>
    %155 = math.tanh %154 : vector<8x128xf32>
    %cst_45 = arith.constant 1.000000e+00 : f32
    %156 = vector.broadcast %cst_45 : f32 to vector<8x128xf32>
    %157 = arith.subf %156, %149 : vector<8x128xf32>
    %158 = arith.mulf %157, %155 : vector<8x128xf32>
    %159 = arith.mulf %149, %130 : vector<8x128xf32>
    %160 = arith.addf %158, %159 : vector<8x128xf32>
    %c32_46 = arith.constant 32 : index
    %c0_47 = arith.constant 0 : index
    %161 = vector.load %arg11[%c32_46, %c0_47] : memref<64x128xf32, #tpu.memory_space<vmem>>, vector<8x128xf32>
    tpu.vector_store %arg11[%c32_46, %c0_47], %160 {strides = array<i32>} : memref<64x128xf32, #tpu.memory_space<vmem>>, vector<8x128xf32>,
    %c40 = arith.constant 40 : index
    %c0_48 = arith.constant 0 : index
    %162 = vector.load %arg10[%c40, %c0_48] : memref<64x384xf32, #tpu.memory_space<vmem>>, vector<8x384xf32>
    %cst_49 = arith.constant dense<0.000000e+00> : vector<8x384xf32>
    %163 = tpu.matmul %160, %7, %cst_49 {dimension_numbers = #tpu.dot_dimension_numbers<[1], [0], [0], [1], [0, 0, 1, 1], [], []>} : vector<8x128xf32>, vector<128x384xf32>, vector<8x384xf32> -> vector<8x384xf32>
    %164 = vector.extract_strided_slice %162 {offsets = [0, 0], sizes = [8, 128], strides = [1, 1]} : vector<8x384xf32> to vector<8x128xf32>
    %165 = vector.extract_strided_slice %163 {offsets = [0, 0], sizes = [8, 128], strides = [1, 1]} : vector<8x384xf32> to vector<8x128xf32>
    %166 = arith.addf %164, %165 : vector<8x128xf32>
    %167 = arith.negf %166 : vector<8x128xf32>
    %168 = math.exp %167 : vector<8x128xf32>
    %cst_50 = arith.constant 1.000000e+00 : f32
    %169 = vector.broadcast %cst_50 : f32 to vector<8x128xf32>
    %170 = arith.addf %169, %168 : vector<8x128xf32>
    %171 = arith.divf %169, %170 : vector<8x128xf32>
    %172 = vector.extract_strided_slice %162 {offsets = [0, 128], sizes = [8, 128], strides = [1, 1]} : vector<8x384xf32> to vector<8x128xf32>
    %173 = vector.extract_strided_slice %163 {offsets = [0, 128], sizes = [8, 128], strides = [1, 1]} : vector<8x384xf32> to vector<8x128xf32>
    %174 = arith.addf %172, %173 : vector<8x128xf32>
    %175 = arith.negf %174 : vector<8x128xf32>
    %176 = math.exp %175 : vector<8x128xf32>
    %cst_51 = arith.constant 1.000000e+00 : f32
    %177 = vector.broadcast %cst_51 : f32 to vector<8x128xf32>
    %178 = arith.addf %177, %176 : vector<8x128xf32>
    %179 = arith.divf %177, %178 : vector<8x128xf32>
    %180 = vector.extract_strided_slice %162 {offsets = [0, 256], sizes = [8, 128], strides = [1, 1]} : vector<8x384xf32> to vector<8x128xf32>
    %181 = vector.extract_strided_slice %163 {offsets = [0, 256], sizes = [8, 128], strides = [1, 1]} : vector<8x384xf32> to vector<8x128xf32>
    %182 = arith.addf %181, %10 : vector<8x128xf32>
    %183 = arith.mulf %171, %182 : vector<8x128xf32>
    %184 = arith.addf %180, %183 : vector<8x128xf32>
    %185 = math.tanh %184 : vector<8x128xf32>
    %cst_52 = arith.constant 1.000000e+00 : f32
    %186 = vector.broadcast %cst_52 : f32 to vector<8x128xf32>
    %187 = arith.subf %186, %179 : vector<8x128xf32>
    %188 = arith.mulf %187, %185 : vector<8x128xf32>
    %189 = arith.mulf %179, %160 : vector<8x128xf32>
    %190 = arith.addf %188, %189 : vector<8x128xf32>
    %c40_53 = arith.constant 40 : index
    %c0_54 = arith.constant 0 : index
    %191 = vector.load %arg11[%c40_53, %c0_54] : memref<64x128xf32, #tpu.memory_space<vmem>>, vector<8x128xf32>
    tpu.vector_store %arg11[%c40_53, %c0_54], %190 {strides = array<i32>} : memref<64x128xf32, #tpu.memory_space<vmem>>, vector<8x128xf32>,
    %c48 = arith.constant 48 : index
    %c0_55 = arith.constant 0 : index
    %192 = vector.load %arg10[%c48, %c0_55] : memref<64x384xf32, #tpu.memory_space<vmem>>, vector<8x384xf32>
    %cst_56 = arith.constant dense<0.000000e+00> : vector<8x384xf32>
    %193 = tpu.matmul %190, %7, %cst_56 {dimension_numbers = #tpu.dot_dimension_numbers<[1], [0], [0], [1], [0, 0, 1, 1], [], []>} : vector<8x128xf32>, vector<128x384xf32>, vector<8x384xf32> -> vector<8x384xf32>
    %194 = vector.extract_strided_slice %192 {offsets = [0, 0], sizes = [8, 128], strides = [1, 1]} : vector<8x384xf32> to vector<8x128xf32>
    %195 = vector.extract_strided_slice %193 {offsets = [0, 0], sizes = [8, 128], strides = [1, 1]} : vector<8x384xf32> to vector<8x128xf32>
    %196 = arith.addf %194, %195 : vector<8x128xf32>
    %197 = arith.negf %196 : vector<8x128xf32>
    %198 = math.exp %197 : vector<8x128xf32>
    %cst_57 = arith.constant 1.000000e+00 : f32
    %199 = vector.broadcast %cst_57 : f32 to vector<8x128xf32>
    %200 = arith.addf %199, %198 : vector<8x128xf32>
    %201 = arith.divf %199, %200 : vector<8x128xf32>
    %202 = vector.extract_strided_slice %192 {offsets = [0, 128], sizes = [8, 128], strides = [1, 1]} : vector<8x384xf32> to vector<8x128xf32>
    %203 = vector.extract_strided_slice %193 {offsets = [0, 128], sizes = [8, 128], strides = [1, 1]} : vector<8x384xf32> to vector<8x128xf32>
    %204 = arith.addf %202, %203 : vector<8x128xf32>
    %205 = arith.negf %204 : vector<8x128xf32>
    %206 = math.exp %205 : vector<8x128xf32>
    %cst_58 = arith.constant 1.000000e+00 : f32
    %207 = vector.broadcast %cst_58 : f32 to vector<8x128xf32>
    %208 = arith.addf %207, %206 : vector<8x128xf32>
    %209 = arith.divf %207, %208 : vector<8x128xf32>
    %210 = vector.extract_strided_slice %192 {offsets = [0, 256], sizes = [8, 128], strides = [1, 1]} : vector<8x384xf32> to vector<8x128xf32>
    %211 = vector.extract_strided_slice %193 {offsets = [0, 256], sizes = [8, 128], strides = [1, 1]} : vector<8x384xf32> to vector<8x128xf32>
    %212 = arith.addf %211, %10 : vector<8x128xf32>
    %213 = arith.mulf %201, %212 : vector<8x128xf32>
    %214 = arith.addf %210, %213 : vector<8x128xf32>
    %215 = math.tanh %214 : vector<8x128xf32>
    %cst_59 = arith.constant 1.000000e+00 : f32
    %216 = vector.broadcast %cst_59 : f32 to vector<8x128xf32>
    %217 = arith.subf %216, %209 : vector<8x128xf32>
    %218 = arith.mulf %217, %215 : vector<8x128xf32>
    %219 = arith.mulf %209, %190 : vector<8x128xf32>
    %220 = arith.addf %218, %219 : vector<8x128xf32>
    %c48_60 = arith.constant 48 : index
    %c0_61 = arith.constant 0 : index
    %221 = vector.load %arg11[%c48_60, %c0_61] : memref<64x128xf32, #tpu.memory_space<vmem>>, vector<8x128xf32>
    tpu.vector_store %arg11[%c48_60, %c0_61], %220 {strides = array<i32>} : memref<64x128xf32, #tpu.memory_space<vmem>>, vector<8x128xf32>,
    %c56 = arith.constant 56 : index
    %c0_62 = arith.constant 0 : index
    %222 = vector.load %arg10[%c56, %c0_62] : memref<64x384xf32, #tpu.memory_space<vmem>>, vector<8x384xf32>
    %cst_63 = arith.constant dense<0.000000e+00> : vector<8x384xf32>
    %223 = tpu.matmul %220, %7, %cst_63 {dimension_numbers = #tpu.dot_dimension_numbers<[1], [0], [0], [1], [0, 0, 1, 1], [], []>} : vector<8x128xf32>, vector<128x384xf32>, vector<8x384xf32> -> vector<8x384xf32>
    %224 = vector.extract_strided_slice %222 {offsets = [0, 0], sizes = [8, 128], strides = [1, 1]} : vector<8x384xf32> to vector<8x128xf32>
    %225 = vector.extract_strided_slice %223 {offsets = [0, 0], sizes = [8, 128], strides = [1, 1]} : vector<8x384xf32> to vector<8x128xf32>
    %226 = arith.addf %224, %225 : vector<8x128xf32>
    %227 = arith.negf %226 : vector<8x128xf32>
    %228 = math.exp %227 : vector<8x128xf32>
    %cst_64 = arith.constant 1.000000e+00 : f32
    %229 = vector.broadcast %cst_64 : f32 to vector<8x128xf32>
    %230 = arith.addf %229, %228 : vector<8x128xf32>
    %231 = arith.divf %229, %230 : vector<8x128xf32>
    %232 = vector.extract_strided_slice %222 {offsets = [0, 128], sizes = [8, 128], strides = [1, 1]} : vector<8x384xf32> to vector<8x128xf32>
    %233 = vector.extract_strided_slice %223 {offsets = [0, 128], sizes = [8, 128], strides = [1, 1]} : vector<8x384xf32> to vector<8x128xf32>
    %234 = arith.addf %232, %233 : vector<8x128xf32>
    %235 = arith.negf %234 : vector<8x128xf32>
    %236 = math.exp %235 : vector<8x128xf32>
    %cst_65 = arith.constant 1.000000e+00 : f32
    %237 = vector.broadcast %cst_65 : f32 to vector<8x128xf32>
    %238 = arith.addf %237, %236 : vector<8x128xf32>
    %239 = arith.divf %237, %238 : vector<8x128xf32>
    %240 = vector.extract_strided_slice %222 {offsets = [0, 256], sizes = [8, 128], strides = [1, 1]} : vector<8x384xf32> to vector<8x128xf32>
    %241 = vector.extract_strided_slice %223 {offsets = [0, 256], sizes = [8, 128], strides = [1, 1]} : vector<8x384xf32> to vector<8x128xf32>
    %242 = arith.addf %241, %10 : vector<8x128xf32>
    %243 = arith.mulf %231, %242 : vector<8x128xf32>
    %244 = arith.addf %240, %243 : vector<8x128xf32>
    %245 = math.tanh %244 : vector<8x128xf32>
    %cst_66 = arith.constant 1.000000e+00 : f32
    %246 = vector.broadcast %cst_66 : f32 to vector<8x128xf32>
    %247 = arith.subf %246, %239 : vector<8x128xf32>
    %248 = arith.mulf %247, %245 : vector<8x128xf32>
    %249 = arith.mulf %239, %220 : vector<8x128xf32>
    %250 = arith.addf %248, %249 : vector<8x128xf32>
    %c56_67 = arith.constant 56 : index
    %c0_68 = arith.constant 0 : index
    %251 = vector.load %arg11[%c56_67, %c0_68] : memref<64x128xf32, #tpu.memory_space<vmem>>, vector<8x128xf32>
    tpu.vector_store %arg11[%c56_67, %c0_68], %250 {strides = array<i32>} : memref<64x128xf32, #tpu.memory_space<vmem>>, vector<8x128xf32>,
    %c0_69 = arith.constant 0 : index
    %c0_70 = arith.constant 0 : index
    %252 = vector.load %arg11[%c0_69, %c0_70] : memref<64x128xf32, #tpu.memory_space<vmem>>, vector<64x128xf32>
    %c0_71 = arith.constant 0 : index
    %c0_72 = arith.constant 0 : index
    %253 = vector.load %arg7[%c0_71, %c0_72] : memref<1x128xf32, #tpu.memory_space<vmem>>, vector<1x128xf32>
    %254 = vector.broadcast %253 : vector<1x128xf32> to vector<64x128xf32>
    %255 = arith.mulf %252, %254 : vector<64x128xf32>
    %cst_73 = arith.constant dense<0.000000e+00> : vector<64xf32>
    %256 = vector.multi_reduction <add>, %255, %cst_73 [1] : vector<64x128xf32> to vector<64xf32>
    %257 = vector.shape_cast %256 : vector<64xf32> to vector<64x1xf32>
    %c0_74 = arith.constant 0 : index
    %c0_75 = arith.constant 0 : index
    %258 = vector.load %arg8[%c0_74, %c0_75] : memref<1x1xf32, #tpu.memory_space<vmem>>, vector<1x1xf32>
    %259 = vector.broadcast %258 : vector<1x1xf32> to vector<64x1xf32>
    %260 = arith.addf %257, %259 : vector<64x1xf32>
    %c0_76 = arith.constant 0 : index
    %c0_77 = arith.constant 0 : index
    %261 = vector.load %arg1[%c0_76, %c0_77] : memref<64x1xf32, #tpu.memory_space<vmem>>, vector<64x1xf32>
    %262 = arith.subf %260, %261 : vector<64x1xf32>
    %c0_78 = arith.constant 0 : index
    %c0_79 = arith.constant 0 : index
    %263 = vector.load %arg2[%c0_78, %c0_79] : memref<64x1xf32, #tpu.memory_space<vmem>>, vector<64x1xf32>
    %264 = arith.mulf %262, %263 : vector<64x1xf32>
    %265 = arith.mulf %264, %264 : vector<64x1xf32>
    %266 = vector.shape_cast %265 : vector<64x1xf32> to vector<1x64x1xf32>
    %cst_80 = arith.constant dense<0.000000e+00> : vector<1xf32>
    %267 = vector.multi_reduction <add>, %266, %cst_80 [1, 2] : vector<1x64x1xf32> to vector<1xf32>
    %268 = vector.shape_cast %267 : vector<1xf32> to vector<1x1x1xf32>
    %269 = vector.extract %268[0, 0, 0] : f32 from vector<1x1x1xf32>
    %cst_81 = arith.constant 1.600000e+01 : f32
    %270 = arith.divf %269, %cst_81 : f32
    %c0_82 = arith.constant 0 : index
    %c0_83 = arith.constant 0 : index
    %271 = memref.load %arg9[%c0_82, %c0_83] : memref<1x1xf32, #tpu.memory_space<smem>>
    memref.store %270, %arg9[%c0_82, %c0_83] : memref<1x1xf32, #tpu.memory_space<smem>>
    return
  }
}

</mosaic_0001>

<llo_original>
// kernel: count_model_loss.1
$region0: #{count_model_loss.1}
  #allocation0 [shape = 'u32[]', space=smem, size = 0x4, offset = 0x4, fixed_abs, tag = 'smem constant byte address 0x4 - core index']
  #allocation1 [shape = 'u32[72,128]{1,0:T(1,128)}', space=vmem, size = 0x9000, scoped, tag = 'internal scratch']
  #allocation2 [shape = 'f32[64,384]{1,0:T(8,128)}', space=vmem, size = 0x18000, scoped, tag = 'scratch operand']
  #allocation3 [shape = 'f32[64,128]{1,0:T(8,128)}', space=vmem, size = 0x8000, scoped, tag = 'scratch operand']
  #allocation4 [shape = 'f32[1,1]{1,0:T(1,128)S(1)}', space=vmem, size = 0x200, scoped, tag = 'scoped memory for count_model_loss.1']
  %s0 = inlined_call_operand.vmem [shape: f32[64,128], index: 0, kind: input, shape index: {}]
  %s1 = inlined_call_operand.vmem [shape: f32[64,1], index: 1, kind: input, shape index: {}]
  %s2 = inlined_call_operand.vmem [shape: f32[64,1], index: 2, kind: input, shape index: {}]
  %s3 = inlined_call_operand.hbm [shape: f32[128,384], index: 3, kind: input, shape index: {}]
  %s4 = inlined_call_operand.hbm [shape: f32[128,384], index: 4, kind: input, shape index: {}]
  %s5 = inlined_call_operand.vmem [shape: f32[1,384], index: 5, kind: input, shape index: {}]
  %s6 = inlined_call_operand.vmem [shape: f32[1,128], index: 6, kind: input, shape index: {}]
  %s7 = inlined_call_operand.vmem [shape: f32[1,128], index: 7, kind: input, shape index: {}]
  %s8 = inlined_call_operand.<no memory space> [shape: f32[1,1], index: 8, kind: input, shape index: {}]
  %s9 = inlined_call_operand.hbm [shape: f32[1,1], index: 9, kind: output, shape index: {}]
  %s10 = sld [smem:[#allocation0]]
  $region54: #{count_model_loss.1} parent=0
    _
  %s12 = ssub.s32 1, %s10
  %s13 = scalar_select 0, %s12, %s10
  %v14 = vstv %s8
  %15 = vst [vmem:[#allocation4] sm:$0x1] %v14
  $region1: #{count_model_loss.1} parent=0
    #allocation5 [shape = 'u8[196608]{0}', space=vmem, size = 0x30000, scoped, tag = 'input window, operand 3, single buffered']
    #allocation6 [shape = 's32[1]{0}', space=sflag, size = 0x4, scoped, tag = 'scoped memory for count_model_loss.1']
    #allocation7 [shape = 's32[1]{0}', space=sflag, size = 0x4, scoped, tag = 'scoped memory for count_model_loss.1']
    #allocation8 [shape = 'u8[196608]{0}', space=vmem, size = 0x30000, scoped, tag = 'input window, operand 4, single buffered']
    #allocation9 [shape = 's32[1]{0}', space=sflag, size = 0x4, scoped, tag = 'scoped memory for count_model_loss.1']
    #allocation10 [shape = 'u8[512]{0}', space=smem, size = 0x200, scoped, tag = 'output window, operand 0, single buffered']
    %16 = vsyncpa [#allocation6], 0
    %17 = vsyncpa [#allocation9], 0
    %18 = vsyncpa [#allocation7], 0
    // Predicated region
    $region2: #{count_model_loss.1} parent=1 // pred_check
      _
    $region3: #{count_model_loss.1} parent=1 // pred_check_branch
      %20 = sbr.rel (0) target = $region5
    $region4: #{count_model_loss.1} parent=1 // pred_region
      _
    $region5: #{count_model_loss.1} parent=1 // pred_fallthru
      _
    // Predicated region
    $region6: #{count_model_loss.1} parent=1 // pred_check
      _
    $region7: #{count_model_loss.1} parent=1 // pred_check_branch
      %22 = sbr.rel (0) target = $region9
    $region8: #{count_model_loss.1} parent=1 // pred_region
      _
    $region9: #{count_model_loss.1} parent=1 // pred_fallthru
      _
    // Predicated region
    $region10: #{count_model_loss.1} parent=1 // pred_check
      _
    $region11: #{count_model_loss.1} parent=1 // pred_check_branch
      %24 = sbr.rel (0) target = $region13
    $region12: #{count_model_loss.1} parent=1 // pred_region
      _
    $region13: #{count_model_loss.1} parent=1 // pred_fallthru
      _
    // Predicated region
    $region14: #{count_model_loss.1} parent=1 // pred_check
      _
    $region15: #{count_model_loss.1} parent=1 // pred_check_branch
      %26 = sbr.rel (0) target = $region17
    $region16: #{count_model_loss.1} parent=1 // pred_region
      %28 = vsyncadd [#allocation6], 0
      %s29 = sshll.u32 %s3, 4
      %s30 = int_to_ptr.hbm [resolvable:$true] %s29
      %s31 = sshll.u32 [#allocation5], 4
      %s32 = int_to_ptr.vmem [resolvable:$true] %s31
      %37 = dma.hbm_to_vmem [thread:$0]  %s30, 6144, %s32, [#allocation6], 384, 384, 24
    $region17: #{count_model_loss.1} parent=1 // pred_fallthru
      _
    // Predicated region
    $region18: #{count_model_loss.1} parent=1 // pred_check
      _
    $region19: #{count_model_loss.1} parent=1 // pred_check_branch
      %39 = sbr.rel (0) target = $region21
    $region20: #{count_model_loss.1} parent=1 // pred_region
      %41 = vsyncadd [#allocation9], 0
      %s42 = sshll.u32 %s4, 4
      %s43 = int_to_ptr.hbm [resolvable:$true] %s42
      %s44 = sshll.u32 [#allocation8], 4
      %s45 = int_to_ptr.vmem [resolvable:$true] %s44
      %50 = dma.hbm_to_vmem [thread:$0]  %s43, 6144, %s45, [#allocation9], 384, 384, 24
    $region21: #{count_model_loss.1} parent=1 // pred_fallthru
      _
    // Predicated region
    $region22: #{count_model_loss.1} parent=1 // pred_check
      _
    $region23: #{count_model_loss.1} parent=1 // pred_check_branch
      %52 = sbr.rel (0) target = $region25
    $region24: #{count_model_loss.1} parent=1 // pred_region
      _
    $region25: #{count_model_loss.1} parent=1 // pred_fallthru
      _
    // Predicated region
    $region26: #{count_model_loss.1} parent=1 // pred_check
      _
    $region27: #{count_model_loss.1} parent=1 // pred_check_branch
      %54 = sbr.rel (0) target = $region29
    $region28: #{count_model_loss.1} parent=1 // pred_region
      _
    $region29: #{count_model_loss.1} parent=1 // pred_fallthru
      _
    // Predicated region
    $region30: #{count_model_loss.1} parent=1 // pred_check
      _
    $region31: #{count_model_loss.1} parent=1 // pred_check_branch
      %56 = sbr.rel (0) target = $region33
    $region32: #{count_model_loss.1} parent=1 // pred_region
      _
    $region33: #{count_model_loss.1} parent=1 // pred_fallthru
      _
    // Predicated region
    $region34: #{count_model_loss.1} parent=1 // pred_check
      _
    $region35: #{count_model_loss.1} parent=1 // pred_check_branch
      %58 = sbr.rel (0) target = $region37
    $region36: #{count_model_loss.1} parent=1 // pred_region
      _
    $region37: #{count_model_loss.1} parent=1 // pred_fallthru
      _
    // Predicated region
    $region38: #{count_model_loss.1} parent=1 // pred_check
      _
    $region39: #{count_model_loss.1} parent=1 // pred_check_branch
      %60 = sbr.rel (0) target = $region41
    $region40: #{count_model_loss.1} parent=1 // pred_region
      %62 = dma.done [#allocation6], 6144
    $region41: #{count_model_loss.1} parent=1 // pred_fallthru
      _
    // Predicated region
    $region42: #{count_model_loss.1} parent=1 // pred_check
      _
    $region43: #{count_model_loss.1} parent=1 // pred_check_branch
      %64 = sbr.rel (0) target = $region45
    $region44: #{count_model_loss.1} parent=1 // pred_region
      %66 = dma.done [#allocation9], 6144
    $region45: #{count_model_loss.1} parent=1 // pred_fallthru
      _
    %v67 = vld [vmem:[%s0] sm:$0xff]
    %v68 = vld [vmem:[%s0 + $0x8] sm:$0xff]
    %v69 = vld [vmem:[%s0 + $0x10] sm:$0xff]
    %v70 = vld [vmem:[%s0 + $0x18] sm:$0xff]
    %v71 = vld [vmem:[%s0 + $0x20] sm:$0xff]
    %v72 = vld [vmem:[%s0 + $0x28] sm:$0xff]
    %v73 = vld [vmem:[%s0 + $0x30] sm:$0xff]
    %v74 = vld [vmem:[%s0 + $0x38] sm:$0xff]
    %v75 = vld [vmem:[#allocation5] sm:$0xff]
    %v76 = vld [vmem:[#allocation5 + $0x8] sm:$0xff]
    %v77 = vld [vmem:[#allocation5 + $0x10] sm:$0xff]
    %v78 = vld [vmem:[#allocation5 + $0x18] sm:$0xff]
    %v79 = vld [vmem:[#allocation5 + $0x20] sm:$0xff]
    %v80 = vld [vmem:[#allocation5 + $0x28] sm:$0xff]
    %v81 = vld [vmem:[#allocation5 + $0x30] sm:$0xff]
    %v82 = vld [vmem:[#allocation5 + $0x38] sm:$0xff]
    %v83 = vld [vmem:[#allocation5 + $0x40] sm:$0xff]
    %v84 = vld [vmem:[#allocation5 + $0x48] sm:$0xff]
    %v85 = vld [vmem:[#allocation5 + $0x50] sm:$0xff]
    %v86 = vld [vmem:[#allocation5 + $0x58] sm:$0xff]
    %v87 = vld [vmem:[#allocation5 + $0x60] sm:$0xff]
    %v88 = vld [vmem:[#allocation5 + $0x68] sm:$0xff]
    %v89 = vld [vmem:[#allocation5 + $0x70] sm:$0xff]
    %v90 = vld [vmem:[#allocation5 + $0x78] sm:$0xff]
    %v91 = vld [vmem:[#allocation5 + $0x80] sm:$0xff]
    %v92 = vld [vmem:[#allocation5 + $0x88] sm:$0xff]
    %v93 = vld [vmem:[#allocation5 + $0x90] sm:$0xff]
    %v94 = vld [vmem:[#allocation5 + $0x98] sm:$0xff]
    %v95 = vld [vmem:[#allocation5 + $0xa0] sm:$0xff]
    %v96 = vld [vmem:[#allocation5 + $0xa8] sm:$0xff]
    %v97 = vld [vmem:[#allocation5 + $0xb0] sm:$0xff]
    %v98 = vld [vmem:[#allocation5 + $0xb8] sm:$0xff]
    %v99 = vld [vmem:[#allocation5 + $0xc0] sm:$0xff]
    %v100 = vld [vmem:[#allocation5 + $0xc8] sm:$0xff]
    %v101 = vld [vmem:[#allocation5 + $0xd0] sm:$0xff]
    %v102 = vld [vmem:[#allocation5 + $0xd8] sm:$0xff]
    %v103 = vld [vmem:[#allocation5 + $0xe0] sm:$0xff]
    %v104 = vld [vmem:[#allocation5 + $0xe8] sm:$0xff]
    %v105 = vld [vmem:[#allocation5 + $0xf0] sm:$0xff]
    %v106 = vld [vmem:[#allocation5 + $0xf8] sm:$0xff]
    %v107 = vld [vmem:[#allocation5 + $0x100] sm:$0xff]
    %v108 = vld [vmem:[#allocation5 + $0x108] sm:$0xff]
    %v109 = vld [vmem:[#allocation5 + $0x110] sm:$0xff]
    %v110 = vld [vmem:[#allocation5 + $0x118] sm:$0xff]
    %v111 = vld [vmem:[#allocation5 + $0x120] sm:$0xff]
    %v112 = vld [vmem:[#allocation5 + $0x128] sm:$0xff]
    %v113 = vld [vmem:[#allocation5 + $0x130] sm:$0xff]
    %v114 = vld [vmem:[#allocation5 + $0x138] sm:$0xff]
    %v115 = vld [vmem:[#allocation5 + $0x140] sm:$0xff]
    %v116 = vld [vmem:[#allocation5 + $0x148] sm:$0xff]
    %v117 = vld [vmem:[#allocation5 + $0x150] sm:$0xff]
    %v118 = vld [vmem:[#allocation5 + $0x158] sm:$0xff]
    %v119 = vld [vmem:[#allocation5 + $0x160] sm:$0xff]
    %v120 = vld [vmem:[#allocation5 + $0x168] sm:$0xff]
    %v121 = vld [vmem:[#allocation5 + $0x170] sm:$0xff]
    %v122 = vld [vmem:[#allocation5 + $0x178] sm:$0xff]
    %v123 = vld [vmem:[%s5] sm:$0x7]
    %v125 = vperm.slane %v123, 0
    %v126 = vperm.slane %v123, 1
    %v127 = vperm.slane %v123, 2
    %131 = vmatpush.msra.mxu0 %v120
    %132 = vmatpush.msra.mxu0 %v117
    %133 = vmatpush.msra.mxu0 %v114
    %134 = vmatpush.msra.mxu0 %v111
    %135 = vmatpush.msra.mxu0 %v108
    %136 = vmatpush.msra.mxu0 %v105
    %137 = vmatpush.msra.mxu0 %v102
    %138 = vmatpush.msra.mxu0 %v99
    %139 = vmatpush.msra.mxu0 %v96
    %140 = vmatpush.msra.mxu0 %v93
    %141 = vmatpush.msra.mxu0 %v90
    %142 = vmatpush.msra.mxu0 %v87
    %143 = vmatpush.msra.mxu0 %v84
    %144 = vmatpush.msra.mxu0 %v81
    %145 = vmatpush.msra.mxu0 %v78
    %146 = vmatpush.msra.mxu0 %v75
    %147 = vmatmul.f32.gmra.mxu0 %v67
    %v148 = vpop.f32.mrf.mxu0
    %v149 = vadd.f32 %v125, %v148
    %150 = vmatmul.f32.gmra.mxu0 %v68
    %v151 = vpop.f32.mrf.mxu0
    %v152 = vadd.f32 %v125, %v151
    %153 = vmatmul.f32.gmra.mxu0 %v69
    %v154 = vpop.f32.mrf.mxu0
    %v155 = vadd.f32 %v125, %v154
    %156 = vmatmul.f32.gmra.mxu0 %v70
    %v157 = vpop.f32.mrf.mxu0
    %v158 = vadd.f32 %v125, %v157
    %159 = vmatmul.f32.gmra.mxu0 %v71
    %v160 = vpop.f32.mrf.mxu0
    %v161 = vadd.f32 %v125, %v160
    %162 = vmatmul.f32.gmra.mxu0 %v72
    %v163 = vpop.f32.mrf.mxu0
    %v164 = vadd.f32 %v125, %v163
    %165 = vmatmul.f32.gmra.mxu0 %v73
    %v166 = vpop.f32.mrf.mxu0
    %v167 = vadd.f32 %v125, %v166
    %168 = vmatmul.f32.gmra.mxu0 %v74
    %v169 = vpop.f32.mrf.mxu0
    %v170 = vadd.f32 %v125, %v169
    %171 = vdwg.mxu0
    %172 = vmatpush.msra.mxu0 %v121
    %173 = vmatpush.msra.mxu0 %v118
    %174 = vmatpush.msra.mxu0 %v115
    %175 = vmatpush.msra.mxu0 %v112
    %176 = vmatpush.msra.mxu0 %v109
    %177 = vmatpush.msra.mxu0 %v106
    %178 = vmatpush.msra.mxu0 %v103
    %179 = vmatpush.msra.mxu0 %v100
    %180 = vmatpush.msra.mxu0 %v97
    %181 = vmatpush.msra.mxu0 %v94
    %182 = vmatpush.msra.mxu0 %v91
    %183 = vmatpush.msra.mxu0 %v88
    %184 = vmatpush.msra.mxu0 %v85
    %185 = vmatpush.msra.mxu0 %v82
    %186 = vmatpush.msra.mxu0 %v79
    %187 = vmatpush.msra.mxu0 %v76
    %188 = vmatmul.f32.gmra.mxu0 %v67
    %v189 = vpop.f32.mrf.mxu0
    %v190 = vadd.f32 %v126, %v189
    %191 = vmatmul.f32.gmra.mxu0 %v68
    %v192 = vpop.f32.mrf.mxu0
    %v193 = vadd.f32 %v126, %v192
    %194 = vmatmul.f32.gmra.mxu0 %v69
    %v195 = vpop.f32.mrf.mxu0
    %v196 = vadd.f32 %v126, %v195
    %197 = vmatmul.f32.gmra.mxu0 %v70
    %v198 = vpop.f32.mrf.mxu0
    %v199 = vadd.f32 %v126, %v198
    %200 = vmatmul.f32.gmra.mxu0 %v71
    %v201 = vpop.f32.mrf.mxu0
    %v202 = vadd.f32 %v126, %v201
    %203 = vmatmul.f32.gmra.mxu0 %v72
    %v204 = vpop.f32.mrf.mxu0
    %v205 = vadd.f32 %v126, %v204
    %206 = vmatmul.f32.gmra.mxu0 %v73
    %v207 = vpop.f32.mrf.mxu0
    %v208 = vadd.f32 %v126, %v207
    %209 = vmatmul.f32.gmra.mxu0 %v74
    %v210 = vpop.f32.mrf.mxu0
    %v211 = vadd.f32 %v126, %v210
    %212 = vdwg.mxu0
    %213 = vmatpush.msra.mxu0 %v122
    %214 = vmatpush.msra.mxu0 %v119
    %215 = vmatpush.msra.mxu0 %v116
    %216 = vmatpush.msra.mxu0 %v113
    %217 = vmatpush.msra.mxu0 %v110
    %218 = vmatpush.msra.mxu0 %v107
    %219 = vmatpush.msra.mxu0 %v104
    %220 = vmatpush.msra.mxu0 %v101
    %221 = vmatpush.msra.mxu0 %v98
    %222 = vmatpush.msra.mxu0 %v95
    %223 = vmatpush.msra.mxu0 %v92
    %224 = vmatpush.msra.mxu0 %v89
    %225 = vmatpush.msra.mxu0 %v86
    %226 = vmatpush.msra.mxu0 %v83
    %227 = vmatpush.msra.mxu0 %v80
    %228 = vmatpush.msra.mxu0 %v77
    %229 = vmatmul.f32.gmra.mxu0 %v67
    %v230 = vpop.f32.mrf.mxu0
    %v231 = vadd.f32 %v127, %v230
    %232 = vmatmul.f32.gmra.mxu0 %v68
    %v233 = vpop.f32.mrf.mxu0
    %v234 = vadd.f32 %v127, %v233
    %235 = vmatmul.f32.gmra.mxu0 %v69
    %v236 = vpop.f32.mrf.mxu0
    %v237 = vadd.f32 %v127, %v236
    %238 = vmatmul.f32.gmra.mxu0 %v70
    %v239 = vpop.f32.mrf.mxu0
    %v240 = vadd.f32 %v127, %v239
    %241 = vmatmul.f32.gmra.mxu0 %v71
    %v242 = vpop.f32.mrf.mxu0
    %v243 = vadd.f32 %v127, %v242
    %244 = vmatmul.f32.gmra.mxu0 %v72
    %v245 = vpop.f32.mrf.mxu0
    %v246 = vadd.f32 %v127, %v245
    %247 = vmatmul.f32.gmra.mxu0 %v73
    %v248 = vpop.f32.mrf.mxu0
    %v249 = vadd.f32 %v127, %v248
    %250 = vmatmul.f32.gmra.mxu0 %v74
    %v251 = vpop.f32.mrf.mxu0
    %v252 = vadd.f32 %v127, %v251
    %253 = vdwg.mxu0
    %254 = vst [vmem:[#allocation2] sm:$0xff] %v149
    %255 = vst [vmem:[#allocation2 + $0x8] sm:$0xff] %v190
    %256 = vst [vmem:[#allocation2 + $0x10] sm:$0xff] %v231
    %257 = vst [vmem:[#allocation2 + $0x18] sm:$0xff] %v152
    %258 = vst [vmem:[#allocation2 + $0x20] sm:$0xff] %v193
    %259 = vst [vmem:[#allocation2 + $0x28] sm:$0xff] %v234
    %260 = vst [vmem:[#allocation2 + $0x30] sm:$0xff] %v155
    %261 = vst [vmem:[#allocation2 + $0x38] sm:$0xff] %v196
    %262 = vst [vmem:[#allocation2 + $0x40] sm:$0xff] %v237
    %263 = vst [vmem:[#allocation2 + $0x48] sm:$0xff] %v158
    %264 = vst [vmem:[#allocation2 + $0x50] sm:$0xff] %v199
    %265 = vst [vmem:[#allocation2 + $0x58] sm:$0xff] %v240
    %266 = vst [vmem:[#allocation2 + $0x60] sm:$0xff] %v161
    %267 = vst [vmem:[#allocation2 + $0x68] sm:$0xff] %v202
    %268 = vst [vmem:[#allocation2 + $0x70] sm:$0xff] %v243
    %269 = vst [vmem:[#allocation2 + $0x78] sm:$0xff] %v164
    %270 = vst [vmem:[#allocation2 + $0x80] sm:$0xff] %v205
    %271 = vst [vmem:[#allocation2 + $0x88] sm:$0xff] %v246
    %272 = vst [vmem:[#allocation2 + $0x90] sm:$0xff] %v167
    %273 = vst [vmem:[#allocation2 + $0x98] sm:$0xff] %v208
    %274 = vst [vmem:[#allocation2 + $0xa0] sm:$0xff] %v249
    %275 = vst [vmem:[#allocation2 + $0xa8] sm:$0xff] %v170
    %276 = vst [vmem:[#allocation2 + $0xb0] sm:$0xff] %v211
    %277 = vst [vmem:[#allocation2 + $0xb8] sm:$0xff] %v252
    %v278 = vld [vmem:[#allocation8] sm:$0xff]
    %v279 = vld [vmem:[#allocation8 + $0x8] sm:$0xff]
    %v280 = vld [vmem:[#allocation8 + $0x10] sm:$0xff]
    %v281 = vld [vmem:[#allocation8 + $0x18] sm:$0xff]
    %v282 = vld [vmem:[#allocation8 + $0x20] sm:$0xff]
    %v283 = vld [vmem:[#allocation8 + $0x28] sm:$0xff]
    %v284 = vld [vmem:[#allocation8 + $0x30] sm:$0xff]
    %v285 = vld [vmem:[#allocation8 + $0x38] sm:$0xff]
    %v286 = vld [vmem:[#allocation8 + $0x40] sm:$0xff]
    %v287 = vld [vmem:[#allocation8 + $0x48] sm:$0xff]
    %v288 = vld [vmem:[#allocation8 + $0x50] sm:$0xff]
    %v289 = vld [vmem:[#allocation8 + $0x58] sm:$0xff]
    %v290 = vld [vmem:[#allocation8 + $0x60] sm:$0xff]
    %v291 = vld [vmem:[#allocation8 + $0x68] sm:$0xff]
    %v292 = vld [vmem:[#allocation8 + $0x70] sm:$0xff]
    %v293 = vld [vmem:[#allocation8 + $0x78] sm:$0xff]
    %v294 = vld [vmem:[#allocation8 + $0x80] sm:$0xff]
    %v295 = vld [vmem:[#allocation8 + $0x88] sm:$0xff]
    %v296 = vld [vmem:[#allocation8 + $0x90] sm:$0xff]
    %v297 = vld [vmem:[#allocation8 + $0x98] sm:$0xff]
    %v298 = vld [vmem:[#allocation8 + $0xa0] sm:$0xff]
    %v299 = vld [vmem:[#allocation8 + $0xa8] sm:$0xff]
    %v300 = vld [vmem:[#allocation8 + $0xb0] sm:$0xff]
    %v301 = vld [vmem:[#allocation8 + $0xb8] sm:$0xff]
    %v302 = vld [vmem:[#allocation8 + $0xc0] sm:$0xff]
    %v303 = vld [vmem:[#allocation8 + $0xc8] sm:$0xff]
    %v304 = vld [vmem:[#allocation8 + $0xd0] sm:$0xff]
    %v305 = vld [vmem:[#allocation8 + $0xd8] sm:$0xff]
    %v306 = vld [vmem:[#allocation8 + $0xe0] sm:$0xff]
    %v307 = vld [vmem:[#allocation8 + $0xe8] sm:$0xff]
    %v308 = vld [vmem:[#allocation8 + $0xf0] sm:$0xff]
    %v309 = vld [vmem:[#allocation8 + $0xf8] sm:$0xff]
    %v310 = vld [vmem:[#allocation8 + $0x100] sm:$0xff]
    %v311 = vld [vmem:[#allocation8 + $0x108] sm:$0xff]
    %v312 = vld [vmem:[#allocation8 + $0x110] sm:$0xff]
    %v313 = vld [vmem:[#allocation8 + $0x118] sm:$0xff]
    %v314 = vld [vmem:[#allocation8 + $0x120] sm:$0xff]
    %v315 = vld [vmem:[#allocation8 + $0x128] sm:$0xff]
    %v316 = vld [vmem:[#allocation8 + $0x130] sm:$0xff]
    %v317 = vld [vmem:[#allocation8 + $0x138] sm:$0xff]
    %v318 = vld [vmem:[#allocation8 + $0x140] sm:$0xff]
    %v319 = vld [vmem:[#allocation8 + $0x148] sm:$0xff]
    %v320 = vld [vmem:[#allocation8 + $0x150] sm:$0xff]
    %v321 = vld [vmem:[#allocation8 + $0x158] sm:$0xff]
    %v322 = vld [vmem:[#allocation8 + $0x160] sm:$0xff]
    %v323 = vld [vmem:[#allocation8 + $0x168] sm:$0xff]
    %v324 = vld [vmem:[#allocation8 + $0x170] sm:$0xff]
    %v325 = vld [vmem:[#allocation8 + $0x178] sm:$0xff]
    %v326 = vld [vmem:[%s6] sm:$0x1]
    %v328 = vperm.slane %v326, 0
    %v330 = vld [vmem:[#allocation2] sm:$0xff]
    %v331 = vld [vmem:[#allocation2 + $0x8] sm:$0xff]
    %v332 = vld [vmem:[#allocation2 + $0x10] sm:$0xff]
    %333 = vmatpush.msra.mxu0 %v323
    %334 = vmatpush.msra.mxu0 %v320
    %335 = vmatpush.msra.mxu0 %v317
    %336 = vmatpush.msra.mxu0 %v314
    %337 = vmatpush.msra.mxu0 %v311
    %338 = vmatpush.msra.mxu0 %v308
    %339 = vmatpush.msra.mxu0 %v305
    %340 = vmatpush.msra.mxu0 %v302
    %341 = vmatpush.msra.mxu0 %v299
    %342 = vmatpush.msra.mxu0 %v296
    %343 = vmatpush.msra.mxu0 %v293
    %344 = vmatpush.msra.mxu0 %v290
    %345 = vmatpush.msra.mxu0 %v287
    %346 = vmatpush.msra.mxu0 %v284
    %347 = vmatpush.msra.mxu0 %v281
    %348 = vmatpush.msra.mxu0 %v278
    %349 = vmatmul.f32.gmra.mxu0 0.0
    %v350 = vpop.f32.mrf.mxu0
    %v351 = vadd.f32 0.0, %v350
    %352 = vdwg.mxu0
    %353 = vmatpush.msra.mxu0 %v324
    %354 = vmatpush.msra.mxu0 %v321
    %355 = vmatpush.msra.mxu0 %v318
    %356 = vmatpush.msra.mxu0 %v315
    %357 = vmatpush.msra.mxu0 %v312
    %358 = vmatpush.msra.mxu0 %v309
    %359 = vmatpush.msra.mxu0 %v306
    %360 = vmatpush.msra.mxu0 %v303
    %361 = vmatpush.msra.mxu0 %v300
    %362 = vmatpush.msra.mxu0 %v297
    %363 = vmatpush.msra.mxu0 %v294
    %364 = vmatpush.msra.mxu0 %v291
    %365 = vmatpush.msra.mxu0 %v288
    %366 = vmatpush.msra.mxu0 %v285
    %367 = vmatpush.msra.mxu0 %v282
    %368 = vmatpush.msra.mxu0 %v279
    %369 = vmatmul.f32.gmra.mxu0 0.0
    %v370 = vpop.f32.mrf.mxu0
    %v371 = vadd.f32 0.0, %v370
    %372 = vdwg.mxu0
    %373 = vmatpush.msra.mxu0 %v325
    %374 = vmatpush.msra.mxu0 %v322
    %375 = vmatpush.msra.mxu0 %v319
    %376 = vmatpush.msra.mxu0 %v316
    %377 = vmatpush.msra.mxu0 %v313
    %378 = vmatpush.msra.mxu0 %v310
    %379 = vmatpush.msra.mxu0 %v307
    %380 = vmatpush.msra.mxu0 %v304
    %381 = vmatpush.msra.mxu0 %v301
    %382 = vmatpush.msra.mxu0 %v298
    %383 = vmatpush.msra.mxu0 %v295
    %384 = vmatpush.msra.mxu0 %v292
    %385 = vmatpush.msra.mxu0 %v289
    %386 = vmatpush.msra.mxu0 %v286
    %387 = vmatpush.msra.mxu0 %v283
    %388 = vmatpush.msra.mxu0 %v280
    %389 = vmatmul.f32.gmra.mxu0 0.0
    %v390 = vpop.f32.mrf.mxu0
    %v391 = vadd.f32 0.0, %v390
    %392 = vdwg.mxu0
    %v393 = vadd.f32 %v330, %v351
    %v394 = vxor.u32 %v393, 2147483648
    %v395 = vmul.f32 %v394, 1.442695
    %v396 = vpow.pop %v395
    %v397 = vadd.f32 %v396, 1.0
    %v398 = vrcp.pop %v397
    %v399 = vmul.f32 %v397, %v398
    %v400 = vsub.f32 1.0, %v399
    %v401 = vmul.f32 %v398, %v400
    %v402 = vadd.f32 %v398, %v401
    %vm403 = vweird.f32 %v397
    %vm404 = vweird.f32 %v398
    %vm405 = vmor %vm403, %vm404
    %v406 = vsel %vm405, %v398, %v402
    %v407 = vand.u32 2147483647, %v397
    %vm408 = vcmp.eq.f32.partialorder %v407, 8.507059e+37
    %v409 = vand.u32 %v397, 2147483648
    %v410 = vor.u32 1.1754944e-38, %v409
    %v411 = vsel %vm408, %v410, %v406
    %v412 = vmul.f32 1.0, %v411
    %v413 = vadd.f32 %v331, %v371
    %v414 = vxor.u32 %v413, 2147483648
    %v415 = vmul.f32 %v414, 1.442695
    %v416 = vpow.pop %v415
    %v417 = vadd.f32 %v416, 1.0
    %v418 = vrcp.pop %v417
    %v419 = vmul.f32 %v417, %v418
    %v420 = vsub.f32 1.0, %v419
    %v421 = vmul.f32 %v418, %v420
    %v422 = vadd.f32 %v418, %v421
    %vm423 = vweird.f32 %v417
    %vm424 = vweird.f32 %v418
    %vm425 = vmor %vm423, %vm424
    %v426 = vsel %vm425, %v418, %v422
    %v427 = vand.u32 2147483647, %v417
    %vm428 = vcmp.eq.f32.partialorder %v427, 8.507059e+37
    %v429 = vand.u32 %v417, 2147483648
    %v430 = vor.u32 1.1754944e-38, %v429
    %v431 = vsel %vm428, %v430, %v426
    %v432 = vmul.f32 1.0, %v431
    %v433 = vadd.f32 %v391, %v328
    %v434 = vmul.f32 %v412, %v433
    %v435 = vadd.f32 %v332, %v434
    %v436 = vtanh.pop %v435
    %v437 = vsub.f32 1.0, %v432
    %v438 = vmul.f32 %v437, %v436
    %v439 = vmul.f32 %v432, 0.0
    %v440 = vadd.f32 %v438, %v439
    %441 = vst [vmem:[#allocation3] sm:$0xff] %v440
    %v442 = vld [vmem:[#allocation2 + $0x18] sm:$0xff]
    %v443 = vld [vmem:[#allocation2 + $0x20] sm:$0xff]
    %v444 = vld [vmem:[#allocation2 + $0x28] sm:$0xff]
    %445 = vmatpush.msra.mxu0 %v323
    %446 = vmatpush.msra.mxu0 %v320
    %447 = vmatpush.msra.mxu0 %v317
    %448 = vmatpush.msra.mxu0 %v314
    %449 = vmatpush.msra.mxu0 %v311
    %450 = vmatpush.msra.mxu0 %v308
    %451 = vmatpush.msra.mxu0 %v305
    %452 = vmatpush.msra.mxu0 %v302
    %453 = vmatpush.msra.mxu0 %v299
    %454 = vmatpush.msra.mxu0 %v296
    %455 = vmatpush.msra.mxu0 %v293
    %456 = vmatpush.msra.mxu0 %v290
    %457 = vmatpush.msra.mxu0 %v287
    %458 = vmatpush.msra.mxu0 %v284
    %459 = vmatpush.msra.mxu0 %v281
    %460 = vmatpush.msra.mxu0 %v278
    %461 = vmatmul.f32.gmra.mxu0 %v440
    %v462 = vpop.f32.mrf.mxu0
    %v463 = vadd.f32 0.0, %v462
    %464 = vdwg.mxu0
    %465 = vmatpush.msra.mxu0 %v324
    %466 = vmatpush.msra.mxu0 %v321
    %467 = vmatpush.msra.mxu0 %v318
    %468 = vmatpush.msra.mxu0 %v315
    %469 = vmatpush.msra.mxu0 %v312
    %470 = vmatpush.msra.mxu0 %v309
    %471 = vmatpush.msra.mxu0 %v306
    %472 = vmatpush.msra.mxu0 %v303
    %473 = vmatpush.msra.mxu0 %v300
    %474 = vmatpush.msra.mxu0 %v297
    %475 = vmatpush.msra.mxu0 %v294
    %476 = vmatpush.msra.mxu0 %v291
    %477 = vmatpush.msra.mxu0 %v288
    %478 = vmatpush.msra.mxu0 %v285
    %479 = vmatpush.msra.mxu0 %v282
    %480 = vmatpush.msra.mxu0 %v279
    %481 = vmatmul.f32.gmra.mxu0 %v440
    %v482 = vpop.f32.mrf.mxu0
    %v483 = vadd.f32 0.0, %v482
    %484 = vdwg.mxu0
    %485 = vmatpush.msra.mxu0 %v325
    %486 = vmatpush.msra.mxu0 %v322
    %487 = vmatpush.msra.mxu0 %v319
    %488 = vmatpush.msra.mxu0 %v316
    %489 = vmatpush.msra.mxu0 %v313
    %490 = vmatpush.msra.mxu0 %v310
    %491 = vmatpush.msra.mxu0 %v307
    %492 = vmatpush.msra.mxu0 %v304
    %493 = vmatpush.msra.mxu0 %v301
    %494 = vmatpush.msra.mxu0 %v298
    %495 = vmatpush.msra.mxu0 %v295
    %496 = vmatpush.msra.mxu0 %v292
    %497 = vmatpush.msra.mxu0 %v289
    %498 = vmatpush.msra.mxu0 %v286
    %499 = vmatpush.msra.mxu0 %v283
    %500 = vmatpush.msra.mxu0 %v280
    %501 = vmatmul.f32.gmra.mxu0 %v440
    %v502 = vpop.f32.mrf.mxu0
    %v503 = vadd.f32 0.0, %v502
    %504 = vdwg.mxu0
    %v505 = vadd.f32 %v442, %v463
    %v506 = vxor.u32 %v505, 2147483648
    %v507 = vmul.f32 %v506, 1.442695
    %v508 = vpow.pop %v507
    %v509 = vadd.f32 %v508, 1.0
    %v510 = vrcp.pop %v509
    %v511 = vmul.f32 %v509, %v510
    %v512 = vsub.f32 1.0, %v511
    %v513 = vmul.f32 %v510, %v512
    %v514 = vadd.f32 %v510, %v513
    %vm515 = vweird.f32 %v509
    %vm516 = vweird.f32 %v510
    %vm517 = vmor %vm515, %vm516
    %v518 = vsel %vm517, %v510, %v514
    %v519 = vand.u32 2147483647, %v509
    %vm520 = vcmp.eq.f32.partialorder %v519, 8.507059e+37
    %v521 = vand.u32 %v509, 2147483648
    %v522 = vor.u32 1.1754944e-38, %v521
    %v523 = vsel %vm520, %v522, %v518
    %v524 = vmul.f32 1.0, %v523
    %v525 = vadd.f32 %v443, %v483
    %v526 = vxor.u32 %v525, 2147483648
    %v527 = vmul.f32 %v526, 1.442695
    %v528 = vpow.pop %v527
    %v529 = vadd.f32 %v528, 1.0
    %v530 = vrcp.pop %v529
    %v531 = vmul.f32 %v529, %v530
    %v532 = vsub.f32 1.0, %v531
    %v533 = vmul.f32 %v530, %v532
    %v534 = vadd.f32 %v530, %v533
    %vm535 = vweird.f32 %v529
    %vm536 = vweird.f32 %v530
    %vm537 = vmor %vm535, %vm536
    %v538 = vsel %vm537, %v530, %v534
    %v539 = vand.u32 2147483647, %v529
    %vm540 = vcmp.eq.f32.partialorder %v539, 8.507059e+37
    %v541 = vand.u32 %v529, 2147483648
    %v542 = vor.u32 1.1754944e-38, %v541
    %v543 = vsel %vm540, %v542, %v538
    %v544 = vmul.f32 1.0, %v543
    %v545 = vadd.f32 %v503, %v328
    %v546 = vmul.f32 %v524, %v545
    %v547 = vadd.f32 %v444, %v546
    %v548 = vtanh.pop %v547
    %v549 = vsub.f32 1.0, %v544
    %v550 = vmul.f32 %v549, %v548
    %v551 = vmul.f32 %v544, %v440
    %v552 = vadd.f32 %v550, %v551
    %553 = vst [vmem:[#allocation3 + $0x8] sm:$0xff] %v552
    %v554 = vld [vmem:[#allocation2 + $0x30] sm:$0xff]
    %v555 = vld [vmem:[#allocation2 + $0x38] sm:$0xff]
    %v556 = vld [vmem:[#allocation2 + $0x40] sm:$0xff]
    %557 = vmatpush.msra.mxu0 %v323
    %558 = vmatpush.msra.mxu0 %v320
    %559 = vmatpush.msra.mxu0 %v317
    %560 = vmatpush.msra.mxu0 %v314
    %561 = vmatpush.msra.mxu0 %v311
    %562 = vmatpush.msra.mxu0 %v308
    %563 = vmatpush.msra.mxu0 %v305
    %564 = vmatpush.msra.mxu0 %v302
    %565 = vmatpush.msra.mxu0 %v299
    %566 = vmatpush.msra.mxu0 %v296
    %567 = vmatpush.msra.mxu0 %v293
    %568 = vmatpush.msra.mxu0 %v290
    %569 = vmatpush.msra.mxu0 %v287
    %570 = vmatpush.msra.mxu0 %v284
    %571 = vmatpush.msra.mxu0 %v281
    %572 = vmatpush.msra.mxu0 %v278
    %573 = vmatmul.f32.gmra.mxu0 %v552
    %v574 = vpop.f32.mrf.mxu0
    %v575 = vadd.f32 0.0, %v574
    %576 = vdwg.mxu0
    %577 = vmatpush.msra.mxu0 %v324
    %578 = vmatpush.msra.mxu0 %v321
    %579 = vmatpush.msra.mxu0 %v318
    %580 = vmatpush.msra.mxu0 %v315
    %581 = vmatpush.msra.mxu0 %v312
    %582 = vmatpush.msra.mxu0 %v309
    %583 = vmatpush.msra.mxu0 %v306
    %584 = vmatpush.msra.mxu0 %v303
    %585 = vmatpush.msra.mxu0 %v300
    %586 = vmatpush.msra.mxu0 %v297
    %587 = vmatpush.msra.mxu0 %v294
    %588 = vmatpush.msra.mxu0 %v291
    %589 = vmatpush.msra.mxu0 %v288
    %590 = vmatpush.msra.mxu0 %v285
    %591 = vmatpush.msra.mxu0 %v282
    %592 = vmatpush.msra.mxu0 %v279
    %593 = vmatmul.f32.gmra.mxu0 %v552
    %v594 = vpop.f32.mrf.mxu0
    %v595 = vadd.f32 0.0, %v594
    %596 = vdwg.mxu0
    %597 = vmatpush.msra.mxu0 %v325
    %598 = vmatpush.msra.mxu0 %v322
    %599 = vmatpush.msra.mxu0 %v319
    %600 = vmatpush.msra.mxu0 %v316
    %601 = vmatpush.msra.mxu0 %v313
    %602 = vmatpush.msra.mxu0 %v310
    %603 = vmatpush.msra.mxu0 %v307
    %604 = vmatpush.msra.mxu0 %v304
    %605 = vmatpush.msra.mxu0 %v301
    %606 = vmatpush.msra.mxu0 %v298
    %607 = vmatpush.msra.mxu0 %v295
    %608 = vmatpush.msra.mxu0 %v292
    %609 = vmatpush.msra.mxu0 %v289
    %610 = vmatpush.msra.mxu0 %v286
    %611 = vmatpush.msra.mxu0 %v283
    %612 = vmatpush.msra.mxu0 %v280
    %613 = vmatmul.f32.gmra.mxu0 %v552
    %v614 = vpop.f32.mrf.mxu0
    %v615 = vadd.f32 0.0, %v614
    %616 = vdwg.mxu0
    %v617 = vadd.f32 %v554, %v575
    %v618 = vxor.u32 %v617, 2147483648
    %v619 = vmul.f32 %v618, 1.442695
    %v620 = vpow.pop %v619
    %v621 = vadd.f32 %v620, 1.0
    %v622 = vrcp.pop %v621
    %v623 = vmul.f32 %v621, %v622
    %v624 = vsub.f32 1.0, %v623
    %v625 = vmul.f32 %v622, %v624
    %v626 = vadd.f32 %v622, %v625
    %vm627 = vweird.f32 %v621
    %vm628 = vweird.f32 %v622
    %vm629 = vmor %vm627, %vm628
    %v630 = vsel %vm629, %v622, %v626
    %v631 = vand.u32 2147483647, %v621
    %vm632 = vcmp.eq.f32.partialorder %v631, 8.507059e+37
    %v633 = vand.u32 %v621, 2147483648
    %v634 = vor.u32 1.1754944e-38, %v633
    %v635 = vsel %vm632, %v634, %v630
    %v636 = vmul.f32 1.0, %v635
    %v637 = vadd.f32 %v555, %v595
    %v638 = vxor.u32 %v637, 2147483648
    %v639 = vmul.f32 %v638, 1.442695
    %v640 = vpow.pop %v639
    %v641 = vadd.f32 %v640, 1.0
    %v642 = vrcp.pop %v641
    %v643 = vmul.f32 %v641, %v642
    %v644 = vsub.f32 1.0, %v643
    %v645 = vmul.f32 %v642, %v644
    %v646 = vadd.f32 %v642, %v645
    %vm647 = vweird.f32 %v641
    %vm648 = vweird.f32 %v642
    %vm649 = vmor %vm647, %vm648
    %v650 = vsel %vm649, %v642, %v646
    %v651 = vand.u32 2147483647, %v641
    %vm652 = vcmp.eq.f32.partialorder %v651, 8.507059e+37
    %v653 = vand.u32 %v641, 2147483648
    %v654 = vor.u32 1.1754944e-38, %v653
    %v655 = vsel %vm652, %v654, %v650
    %v656 = vmul.f32 1.0, %v655
    %v657 = vadd.f32 %v615, %v328
    %v658 = vmul.f32 %v636, %v657
    %v659 = vadd.f32 %v556, %v658
    %v660 = vtanh.pop %v659
    %v661 = vsub.f32 1.0, %v656
    %v662 = vmul.f32 %v661, %v660
    %v663 = vmul.f32 %v656, %v552
    %v664 = vadd.f32 %v662, %v663
    %665 = vst [vmem:[#allocation3 + $0x10] sm:$0xff] %v664
    %v666 = vld [vmem:[#allocation2 + $0x48] sm:$0xff]
    %v667 = vld [vmem:[#allocation2 + $0x50] sm:$0xff]
    %v668 = vld [vmem:[#allocation2 + $0x58] sm:$0xff]
    %669 = vmatpush.msra.mxu0 %v323
    %670 = vmatpush.msra.mxu0 %v320
    %671 = vmatpush.msra.mxu0 %v317
    %672 = vmatpush.msra.mxu0 %v314
    %673 = vmatpush.msra.mxu0 %v311
    %674 = vmatpush.msra.mxu0 %v308
    %675 = vmatpush.msra.mxu0 %v305
    %676 = vmatpush.msra.mxu0 %v302
    %677 = vmatpush.msra.mxu0 %v299
    %678 = vmatpush.msra.mxu0 %v296
    %679 = vmatpush.msra.mxu0 %v293
    %680 = vmatpush.msra.mxu0 %v290
    %681 = vmatpush.msra.mxu0 %v287
    %682 = vmatpush.msra.mxu0 %v284
    %683 = vmatpush.msra.mxu0 %v281
    %684 = vmatpush.msra.mxu0 %v278
    %685 = vmatmul.f32.gmra.mxu0 %v664
    %v686 = vpop.f32.mrf.mxu0
    %v687 = vadd.f32 0.0, %v686
    %688 = vdwg.mxu0
    %689 = vmatpush.msra.mxu0 %v324
    %690 = vmatpush.msra.mxu0 %v321
    %691 = vmatpush.msra.mxu0 %v318
    %692 = vmatpush.msra.mxu0 %v315
    %693 = vmatpush.msra.mxu0 %v312
    %694 = vmatpush.msra.mxu0 %v309
    %695 = vmatpush.msra.mxu0 %v306
    %696 = vmatpush.msra.mxu0 %v303
    %697 = vmatpush.msra.mxu0 %v300
    %698 = vmatpush.msra.mxu0 %v297
    %699 = vmatpush.msra.mxu0 %v294
    %700 = vmatpush.msra.mxu0 %v291
    %701 = vmatpush.msra.mxu0 %v288
    %702 = vmatpush.msra.mxu0 %v285
    %703 = vmatpush.msra.mxu0 %v282
    %704 = vmatpush.msra.mxu0 %v279
    %705 = vmatmul.f32.gmra.mxu0 %v664
    %v706 = vpop.f32.mrf.mxu0
    %v707 = vadd.f32 0.0, %v706
    %708 = vdwg.mxu0
    %709 = vmatpush.msra.mxu0 %v325
    %710 = vmatpush.msra.mxu0 %v322
    %711 = vmatpush.msra.mxu0 %v319
    %712 = vmatpush.msra.mxu0 %v316
    %713 = vmatpush.msra.mxu0 %v313
    %714 = vmatpush.msra.mxu0 %v310
    %715 = vmatpush.msra.mxu0 %v307
    %716 = vmatpush.msra.mxu0 %v304
    %717 = vmatpush.msra.mxu0 %v301
    %718 = vmatpush.msra.mxu0 %v298
    %719 = vmatpush.msra.mxu0 %v295
    %720 = vmatpush.msra.mxu0 %v292
    %721 = vmatpush.msra.mxu0 %v289
    %722 = vmatpush.msra.mxu0 %v286
    %723 = vmatpush.msra.mxu0 %v283
    %724 = vmatpush.msra.mxu0 %v280
    %725 = vmatmul.f32.gmra.mxu0 %v664
    %v726 = vpop.f32.mrf.mxu0
    %v727 = vadd.f32 0.0, %v726
    %728 = vdwg.mxu0
    %v729 = vadd.f32 %v666, %v687
    %v730 = vxor.u32 %v729, 2147483648
    %v731 = vmul.f32 %v730, 1.442695
    %v732 = vpow.pop %v731
    %v733 = vadd.f32 %v732, 1.0
    %v734 = vrcp.pop %v733
    %v735 = vmul.f32 %v733, %v734
    %v736 = vsub.f32 1.0, %v735
    %v737 = vmul.f32 %v734, %v736
    %v738 = vadd.f32 %v734, %v737
    %vm739 = vweird.f32 %v733
    %vm740 = vweird.f32 %v734
    %vm741 = vmor %vm739, %vm740
    %v742 = vsel %vm741, %v734, %v738
    %v743 = vand.u32 2147483647, %v733
    %vm744 = vcmp.eq.f32.partialorder %v743, 8.507059e+37
    %v745 = vand.u32 %v733, 2147483648
    %v746 = vor.u32 1.1754944e-38, %v745
    %v747 = vsel %vm744, %v746, %v742
    %v748 = vmul.f32 1.0, %v747
    %v749 = vadd.f32 %v667, %v707
    %v750 = vxor.u32 %v749, 2147483648
    %v751 = vmul.f32 %v750, 1.442695
    %v752 = vpow.pop %v751
    %v753 = vadd.f32 %v752, 1.0
    %v754 = vrcp.pop %v753
    %v755 = vmul.f32 %v753, %v754
    %v756 = vsub.f32 1.0, %v755
    %v757 = vmul.f32 %v754, %v756
    %v758 = vadd.f32 %v754, %v757
    %vm759 = vweird.f32 %v753
    %vm760 = vweird.f32 %v754
    %vm761 = vmor %vm759, %vm760
    %v762 = vsel %vm761, %v754, %v758
    %v763 = vand.u32 2147483647, %v753
    %vm764 = vcmp.eq.f32.partialorder %v763, 8.507059e+37
    %v765 = vand.u32 %v753, 2147483648
    %v766 = vor.u32 1.1754944e-38, %v765
    %v767 = vsel %vm764, %v766, %v762
    %v768 = vmul.f32 1.0, %v767
    %v769 = vadd.f32 %v727, %v328
    %v770 = vmul.f32 %v748, %v769
    %v771 = vadd.f32 %v668, %v770
    %v772 = vtanh.pop %v771
    %v773 = vsub.f32 1.0, %v768
    %v774 = vmul.f32 %v773, %v772
    %v775 = vmul.f32 %v768, %v664
    %v776 = vadd.f32 %v774, %v775
    %777 = vst [vmem:[#allocation3 + $0x18] sm:$0xff] %v776
    %v778 = vld [vmem:[#allocation2 + $0x60] sm:$0xff]
    %v779 = vld [vmem:[#allocation2 + $0x68] sm:$0xff]
    %v780 = vld [vmem:[#allocation2 + $0x70] sm:$0xff]
    %781 = vmatpush.msra.mxu0 %v323
    %782 = vmatpush.msra.mxu0 %v320
    %783 = vmatpush.msra.mxu0 %v317
    %784 = vmatpush.msra.mxu0 %v314
    %785 = vmatpush.msra.mxu0 %v311
    %786 = vmatpush.msra.mxu0 %v308
    %787 = vmatpush.msra.mxu0 %v305
    %788 = vmatpush.msra.mxu0 %v302
    %789 = vmatpush.msra.mxu0 %v299
    %790 = vmatpush.msra.mxu0 %v296
    %791 = vmatpush.msra.mxu0 %v293
    %792 = vmatpush.msra.mxu0 %v290
    %793 = vmatpush.msra.mxu0 %v287
    %794 = vmatpush.msra.mxu0 %v284
    %795 = vmatpush.msra.mxu0 %v281
    %796 = vmatpush.msra.mxu0 %v278
    %797 = vmatmul.f32.gmra.mxu0 %v776
    %v798 = vpop.f32.mrf.mxu0
    %v799 = vadd.f32 0.0, %v798
    %800 = vdwg.mxu0
    %801 = vmatpush.msra.mxu0 %v324
    %802 = vmatpush.msra.mxu0 %v321
    %803 = vmatpush.msra.mxu0 %v318
    %804 = vmatpush.msra.mxu0 %v315
    %805 = vmatpush.msra.mxu0 %v312
    %806 = vmatpush.msra.mxu0 %v309
    %807 = vmatpush.msra.mxu0 %v306
    %808 = vmatpush.msra.mxu0 %v303
    %809 = vmatpush.msra.mxu0 %v300
    %810 = vmatpush.msra.mxu0 %v297
    %811 = vmatpush.msra.mxu0 %v294
    %812 = vmatpush.msra.mxu0 %v291
    %813 = vmatpush.msra.mxu0 %v288
    %814 = vmatpush.msra.mxu0 %v285
    %815 = vmatpush.msra.mxu0 %v282
    %816 = vmatpush.msra.mxu0 %v279
    %817 = vmatmul.f32.gmra.mxu0 %v776
    %v818 = vpop.f32.mrf.mxu0
    %v819 = vadd.f32 0.0, %v818
    %820 = vdwg.mxu0
    %821 = vmatpush.msra.mxu0 %v325
    %822 = vmatpush.msra.mxu0 %v322
    %823 = vmatpush.msra.mxu0 %v319
    %824 = vmatpush.msra.mxu0 %v316
    %825 = vmatpush.msra.mxu0 %v313
    %826 = vmatpush.msra.mxu0 %v310
    %827 = vmatpush.msra.mxu0 %v307
    %828 = vmatpush.msra.mxu0 %v304
    %829 = vmatpush.msra.mxu0 %v301
    %830 = vmatpush.msra.mxu0 %v298
    %831 = vmatpush.msra.mxu0 %v295
    %832 = vmatpush.msra.mxu0 %v292
    %833 = vmatpush.msra.mxu0 %v289
    %834 = vmatpush.msra.mxu0 %v286
    %835 = vmatpush.msra.mxu0 %v283
    %836 = vmatpush.msra.mxu0 %v280
    %837 = vmatmul.f32.gmra.mxu0 %v776
    %v838 = vpop.f32.mrf.mxu0
    %v839 = vadd.f32 0.0, %v838
    %840 = vdwg.mxu0
    %v841 = vadd.f32 %v778, %v799
    %v842 = vxor.u32 %v841, 2147483648
    %v843 = vmul.f32 %v842, 1.442695
    %v844 = vpow.pop %v843
    %v845 = vadd.f32 %v844, 1.0
    %v846 = vrcp.pop %v845
    %v847 = vmul.f32 %v845, %v846
    %v848 = vsub.f32 1.0, %v847
    %v849 = vmul.f32 %v846, %v848
    %v850 = vadd.f32 %v846, %v849
    %vm851 = vweird.f32 %v845
    %vm852 = vweird.f32 %v846
    %vm853 = vmor %vm851, %vm852
    %v854 = vsel %vm853, %v846, %v850
    %v855 = vand.u32 2147483647, %v845
    %vm856 = vcmp.eq.f32.partialorder %v855, 8.507059e+37
    %v857 = vand.u32 %v845, 2147483648
    %v858 = vor.u32 1.1754944e-38, %v857
    %v859 = vsel %vm856, %v858, %v854
    %v860 = vmul.f32 1.0, %v859
    %v861 = vadd.f32 %v779, %v819
    %v862 = vxor.u32 %v861, 2147483648
    %v863 = vmul.f32 %v862, 1.442695
    %v864 = vpow.pop %v863
    %v865 = vadd.f32 %v864, 1.0
    %v866 = vrcp.pop %v865
    %v867 = vmul.f32 %v865, %v866
    %v868 = vsub.f32 1.0, %v867
    %v869 = vmul.f32 %v866, %v868
    %v870 = vadd.f32 %v866, %v869
    %vm871 = vweird.f32 %v865
    %vm872 = vweird.f32 %v866
    %vm873 = vmor %vm871, %vm872
    %v874 = vsel %vm873, %v866, %v870
    %v875 = vand.u32 2147483647, %v865
    %vm876 = vcmp.eq.f32.partialorder %v875, 8.507059e+37
    %v877 = vand.u32 %v865, 2147483648
    %v878 = vor.u32 1.1754944e-38, %v877
    %v879 = vsel %vm876, %v878, %v874
    %v880 = vmul.f32 1.0, %v879
    %v881 = vadd.f32 %v839, %v328
    %v882 = vmul.f32 %v860, %v881
    %v883 = vadd.f32 %v780, %v882
    %v884 = vtanh.pop %v883
    %v885 = vsub.f32 1.0, %v880
    %v886 = vmul.f32 %v885, %v884
    %v887 = vmul.f32 %v880, %v776
    %v888 = vadd.f32 %v886, %v887
    %889 = vst [vmem:[#allocation3 + $0x20] sm:$0xff] %v888
    %v890 = vld [vmem:[#allocation2 + $0x78] sm:$0xff]
    %v891 = vld [vmem:[#allocation2 + $0x80] sm:$0xff]
    %v892 = vld [vmem:[#allocation2 + $0x88] sm:$0xff]
    %893 = vmatpush.msra.mxu0 %v323
    %894 = vmatpush.msra.mxu0 %v320
    %895 = vmatpush.msra.mxu0 %v317
    %896 = vmatpush.msra.mxu0 %v314
    %897 = vmatpush.msra.mxu0 %v311
    %898 = vmatpush.msra.mxu0 %v308
    %899 = vmatpush.msra.mxu0 %v305
    %900 = vmatpush.msra.mxu0 %v302
    %901 = vmatpush.msra.mxu0 %v299
    %902 = vmatpush.msra.mxu0 %v296
    %903 = vmatpush.msra.mxu0 %v293
    %904 = vmatpush.msra.mxu0 %v290
    %905 = vmatpush.msra.mxu0 %v287
    %906 = vmatpush.msra.mxu0 %v284
    %907 = vmatpush.msra.mxu0 %v281
    %908 = vmatpush.msra.mxu0 %v278
    %909 = vmatmul.f32.gmra.mxu0 %v888
    %v910 = vpop.f32.mrf.mxu0
    %v911 = vadd.f32 0.0, %v910
    %912 = vdwg.mxu0
    %913 = vmatpush.msra.mxu0 %v324
    %914 = vmatpush.msra.mxu0 %v321
    %915 = vmatpush.msra.mxu0 %v318
    %916 = vmatpush.msra.mxu0 %v315
    %917 = vmatpush.msra.mxu0 %v312
    %918 = vmatpush.msra.mxu0 %v309
    %919 = vmatpush.msra.mxu0 %v306
    %920 = vmatpush.msra.mxu0 %v303
    %921 = vmatpush.msra.mxu0 %v300
    %922 = vmatpush.msra.mxu0 %v297
    %923 = vmatpush.msra.mxu0 %v294
    %924 = vmatpush.msra.mxu0 %v291
    %925 = vmatpush.msra.mxu0 %v288
    %926 = vmatpush.msra.mxu0 %v285
    %927 = vmatpush.msra.mxu0 %v282
    %928 = vmatpush.msra.mxu0 %v279
    %929 = vmatmul.f32.gmra.mxu0 %v888
    %v930 = vpop.f32.mrf.mxu0
    %v931 = vadd.f32 0.0, %v930
    %932 = vdwg.mxu0
    %933 = vmatpush.msra.mxu0 %v325
    %934 = vmatpush.msra.mxu0 %v322
    %935 = vmatpush.msra.mxu0 %v319
    %936 = vmatpush.msra.mxu0 %v316
    %937 = vmatpush.msra.mxu0 %v313
    %938 = vmatpush.msra.mxu0 %v310
    %939 = vmatpush.msra.mxu0 %v307
    %940 = vmatpush.msra.mxu0 %v304
    %941 = vmatpush.msra.mxu0 %v301
    %942 = vmatpush.msra.mxu0 %v298
    %943 = vmatpush.msra.mxu0 %v295
    %944 = vmatpush.msra.mxu0 %v292
    %945 = vmatpush.msra.mxu0 %v289
    %946 = vmatpush.msra.mxu0 %v286
    %947 = vmatpush.msra.mxu0 %v283
    %948 = vmatpush.msra.mxu0 %v280
    %949 = vmatmul.f32.gmra.mxu0 %v888
    %v950 = vpop.f32.mrf.mxu0
    %v951 = vadd.f32 0.0, %v950
    %952 = vdwg.mxu0
    %v953 = vadd.f32 %v890, %v911
    %v954 = vxor.u32 %v953, 2147483648
    %v955 = vmul.f32 %v954, 1.442695
    %v956 = vpow.pop %v955
    %v957 = vadd.f32 %v956, 1.0
    %v958 = vrcp.pop %v957
    %v959 = vmul.f32 %v957, %v958
    %v960 = vsub.f32 1.0, %v959
    %v961 = vmul.f32 %v958, %v960
    %v962 = vadd.f32 %v958, %v961
    %vm963 = vweird.f32 %v957
    %vm964 = vweird.f32 %v958
    %vm965 = vmor %vm963, %vm964
    %v966 = vsel %vm965, %v958, %v962
    %v967 = vand.u32 2147483647, %v957
    %vm968 = vcmp.eq.f32.partialorder %v967, 8.507059e+37
    %v969 = vand.u32 %v957, 2147483648
    %v970 = vor.u32 1.1754944e-38, %v969
    %v971 = vsel %vm968, %v970, %v966
    %v972 = vmul.f32 1.0, %v971
    %v973 = vadd.f32 %v891, %v931
    %v974 = vxor.u32 %v973, 2147483648
    %v975 = vmul.f32 %v974, 1.442695
    %v976 = vpow.pop %v975
    %v977 = vadd.f32 %v976, 1.0
    %v978 = vrcp.pop %v977
    %v979 = vmul.f32 %v977, %v978
    %v980 = vsub.f32 1.0, %v979
    %v981 = vmul.f32 %v978, %v980
    %v982 = vadd.f32 %v978, %v981
    %vm983 = vweird.f32 %v977
    %vm984 = vweird.f32 %v978
    %vm985 = vmor %vm983, %vm984
    %v986 = vsel %vm985, %v978, %v982
    %v987 = vand.u32 2147483647, %v977
    %vm988 = vcmp.eq.f32.partialorder %v987, 8.507059e+37
    %v989 = vand.u32 %v977, 2147483648
    %v990 = vor.u32 1.1754944e-38, %v989
    %v991 = vsel %vm988, %v990, %v986
    %v992 = vmul.f32 1.0, %v991
    %v993 = vadd.f32 %v951, %v328
    %v994 = vmul.f32 %v972, %v993
    %v995 = vadd.f32 %v892, %v994
    %v996 = vtanh.pop %v995
    %v997 = vsub.f32 1.0, %v992
    %v998 = vmul.f32 %v997, %v996
    %v999 = vmul.f32 %v992, %v888
    %v1000 = vadd.f32 %v998, %v999
    %1001 = vst [vmem:[#allocation3 + $0x28] sm:$0xff] %v1000
    %v1002 = vld [vmem:[#allocation2 + $0x90] sm:$0xff]
    %v1003 = vld [vmem:[#allocation2 + $0x98] sm:$0xff]
    %v1004 = vld [vmem:[#allocation2 + $0xa0] sm:$0xff]
    %1005 = vmatpush.msra.mxu0 %v323
    %1006 = vmatpush.msra.mxu0 %v320
    %1007 = vmatpush.msra.mxu0 %v317
    %1008 = vmatpush.msra.mxu0 %v314
    %1009 = vmatpush.msra.mxu0 %v311
    %1010 = vmatpush.msra.mxu0 %v308
    %1011 = vmatpush.msra.mxu0 %v305
    %1012 = vmatpush.msra.mxu0 %v302
    %1013 = vmatpush.msra.mxu0 %v299
    %1014 = vmatpush.msra.mxu0 %v296
    %1015 = vmatpush.msra.mxu0 %v293
    %1016 = vmatpush.msra.mxu0 %v290
    %1017 = vmatpush.msra.mxu0 %v287
    %1018 = vmatpush.msra.mxu0 %v284
    %1019 = vmatpush.msra.mxu0 %v281
    %1020 = vmatpush.msra.mxu0 %v278
    %1021 = vmatmul.f32.gmra.mxu0 %v1000
    %v1022 = vpop.f32.mrf.mxu0
    %v1023 = vadd.f32 0.0, %v1022
    %1024 = vdwg.mxu0
    %1025 = vmatpush.msra.mxu0 %v324
    %1026 = vmatpush.msra.mxu0 %v321
    %1027 = vmatpush.msra.mxu0 %v318
    %1028 = vmatpush.msra.mxu0 %v315
    %1029 = vmatpush.msra.mxu0 %v312
    %1030 = vmatpush.msra.mxu0 %v309
    %1031 = vmatpush.msra.mxu0 %v306
    %1032 = vmatpush.msra.mxu0 %v303
    %1033 = vmatpush.msra.mxu0 %v300
    %1034 = vmatpush.msra.mxu0 %v297
    %1035 = vmatpush.msra.mxu0 %v294
    %1036 = vmatpush.msra.mxu0 %v291
    %1037 = vmatpush.msra.mxu0 %v288
    %1038 = vmatpush.msra.mxu0 %v285
    %1039 = vmatpush.msra.mxu0 %v282
    %1040 = vmatpush.msra.mxu0 %v279
    %1041 = vmatmul.f32.gmra.mxu0 %v1000
    %v1042 = vpop.f32.mrf.mxu0
    %v1043 = vadd.f32 0.0, %v1042
    %1044 = vdwg.mxu0
    %1045 = vmatpush.msra.mxu0 %v325
    %1046 = vmatpush.msra.mxu0 %v322
    %1047 = vmatpush.msra.mxu0 %v319
    %1048 = vmatpush.msra.mxu0 %v316
    %1049 = vmatpush.msra.mxu0 %v313
    %1050 = vmatpush.msra.mxu0 %v310
    %1051 = vmatpush.msra.mxu0 %v307
    %1052 = vmatpush.msra.mxu0 %v304
    %1053 = vmatpush.msra.mxu0 %v301
    %1054 = vmatpush.msra.mxu0 %v298
    %1055 = vmatpush.msra.mxu0 %v295
    %1056 = vmatpush.msra.mxu0 %v292
    %1057 = vmatpush.msra.mxu0 %v289
    %1058 = vmatpush.msra.mxu0 %v286
    %1059 = vmatpush.msra.mxu0 %v283
    %1060 = vmatpush.msra.mxu0 %v280
    %1061 = vmatmul.f32.gmra.mxu0 %v1000
    %v1062 = vpop.f32.mrf.mxu0
    %v1063 = vadd.f32 0.0, %v1062
    %1064 = vdwg.mxu0
    %v1065 = vadd.f32 %v1002, %v1023
    %v1066 = vxor.u32 %v1065, 2147483648
    %v1067 = vmul.f32 %v1066, 1.442695
    %v1068 = vpow.pop %v1067
    %v1069 = vadd.f32 %v1068, 1.0
    %v1070 = vrcp.pop %v1069
    %v1071 = vmul.f32 %v1069, %v1070
    %v1072 = vsub.f32 1.0, %v1071
    %v1073 = vmul.f32 %v1070, %v1072
    %v1074 = vadd.f32 %v1070, %v1073
    %vm1075 = vweird.f32 %v1069
    %vm1076 = vweird.f32 %v1070
    %vm1077 = vmor %vm1075, %vm1076
    %v1078 = vsel %vm1077, %v1070, %v1074
    %v1079 = vand.u32 2147483647, %v1069
    %vm1080 = vcmp.eq.f32.partialorder %v1079, 8.507059e+37
    %v1081 = vand.u32 %v1069, 2147483648
    %v1082 = vor.u32 1.1754944e-38, %v1081
    %v1083 = vsel %vm1080, %v1082, %v1078
    %v1084 = vmul.f32 1.0, %v1083
    %v1085 = vadd.f32 %v1003, %v1043
    %v1086 = vxor.u32 %v1085, 2147483648
    %v1087 = vmul.f32 %v1086, 1.442695
    %v1088 = vpow.pop %v1087
    %v1089 = vadd.f32 %v1088, 1.0
    %v1090 = vrcp.pop %v1089
    %v1091 = vmul.f32 %v1089, %v1090
    %v1092 = vsub.f32 1.0, %v1091
    %v1093 = vmul.f32 %v1090, %v1092
    %v1094 = vadd.f32 %v1090, %v1093
    %vm1095 = vweird.f32 %v1089
    %vm1096 = vweird.f32 %v1090
    %vm1097 = vmor %vm1095, %vm1096
    %v1098 = vsel %vm1097, %v1090, %v1094
    %v1099 = vand.u32 2147483647, %v1089
    %vm1100 = vcmp.eq.f32.partialorder %v1099, 8.507059e+37
    %v1101 = vand.u32 %v1089, 2147483648
    %v1102 = vor.u32 1.1754944e-38, %v1101
    %v1103 = vsel %vm1100, %v1102, %v1098
    %v1104 = vmul.f32 1.0, %v1103
    %v1105 = vadd.f32 %v1063, %v328
    %v1106 = vmul.f32 %v1084, %v1105
    %v1107 = vadd.f32 %v1004, %v1106
    %v1108 = vtanh.pop %v1107
    %v1109 = vsub.f32 1.0, %v1104
    %v1110 = vmul.f32 %v1109, %v1108
    %v1111 = vmul.f32 %v1104, %v1000
    %v1112 = vadd.f32 %v1110, %v1111
    %1113 = vst [vmem:[#allocation3 + $0x30] sm:$0xff] %v1112
    %v1114 = vld [vmem:[#allocation2 + $0xa8] sm:$0xff]
    %v1115 = vld [vmem:[#allocation2 + $0xb0] sm:$0xff]
    %v1116 = vld [vmem:[#allocation2 + $0xb8] sm:$0xff]
    %1117 = vmatpush.msra.mxu0 %v323
    %1118 = vmatpush.msra.mxu0 %v320
    %1119 = vmatpush.msra.mxu0 %v317
    %1120 = vmatpush.msra.mxu0 %v314
    %1121 = vmatpush.msra.mxu0 %v311
    %1122 = vmatpush.msra.mxu0 %v308
    %1123 = vmatpush.msra.mxu0 %v305
    %1124 = vmatpush.msra.mxu0 %v302
    %1125 = vmatpush.msra.mxu0 %v299
    %1126 = vmatpush.msra.mxu0 %v296
    %1127 = vmatpush.msra.mxu0 %v293
    %1128 = vmatpush.msra.mxu0 %v290
    %1129 = vmatpush.msra.mxu0 %v287
    %1130 = vmatpush.msra.mxu0 %v284
    %1131 = vmatpush.msra.mxu0 %v281
    %1132 = vmatpush.msra.mxu0 %v278
    %1133 = vmatmul.f32.gmra.mxu0 %v1112
    %v1134 = vpop.f32.mrf.mxu0
    %v1135 = vadd.f32 0.0, %v1134
    %1136 = vdwg.mxu0
    %1137 = vmatpush.msra.mxu0 %v324
    %1138 = vmatpush.msra.mxu0 %v321
    %1139 = vmatpush.msra.mxu0 %v318
    %1140 = vmatpush.msra.mxu0 %v315
    %1141 = vmatpush.msra.mxu0 %v312
    %1142 = vmatpush.msra.mxu0 %v309
    %1143 = vmatpush.msra.mxu0 %v306
    %1144 = vmatpush.msra.mxu0 %v303
    %1145 = vmatpush.msra.mxu0 %v300
    %1146 = vmatpush.msra.mxu0 %v297
    %1147 = vmatpush.msra.mxu0 %v294
    %1148 = vmatpush.msra.mxu0 %v291
    %1149 = vmatpush.msra.mxu0 %v288
    %1150 = vmatpush.msra.mxu0 %v285
    %1151 = vmatpush.msra.mxu0 %v282
    %1152 = vmatpush.msra.mxu0 %v279
    %1153 = vmatmul.f32.gmra.mxu0 %v1112
    %v1154 = vpop.f32.mrf.mxu0
    %v1155 = vadd.f32 0.0, %v1154
    %1156 = vdwg.mxu0
    %1157 = vmatpush.msra.mxu0 %v325
    %1158 = vmatpush.msra.mxu0 %v322
    %1159 = vmatpush.msra.mxu0 %v319
    %1160 = vmatpush.msra.mxu0 %v316
    %1161 = vmatpush.msra.mxu0 %v313
    %1162 = vmatpush.msra.mxu0 %v310
    %1163 = vmatpush.msra.mxu0 %v307
    %1164 = vmatpush.msra.mxu0 %v304
    %1165 = vmatpush.msra.mxu0 %v301
    %1166 = vmatpush.msra.mxu0 %v298
    %1167 = vmatpush.msra.mxu0 %v295
    %1168 = vmatpush.msra.mxu0 %v292
    %1169 = vmatpush.msra.mxu0 %v289
    %1170 = vmatpush.msra.mxu0 %v286
    %1171 = vmatpush.msra.mxu0 %v283
    %1172 = vmatpush.msra.mxu0 %v280
    %1173 = vmatmul.f32.gmra.mxu0 %v1112
    %v1174 = vpop.f32.mrf.mxu0
    %v1175 = vadd.f32 0.0, %v1174
    %1176 = vdwg.mxu0
    %v1177 = vadd.f32 %v1114, %v1135
    %v1178 = vxor.u32 %v1177, 2147483648
    %v1179 = vmul.f32 %v1178, 1.442695
    %v1180 = vpow.pop %v1179
    %v1181 = vadd.f32 %v1180, 1.0
    %v1182 = vrcp.pop %v1181
    %v1183 = vmul.f32 %v1181, %v1182
    %v1184 = vsub.f32 1.0, %v1183
    %v1185 = vmul.f32 %v1182, %v1184
    %v1186 = vadd.f32 %v1182, %v1185
    %vm1187 = vweird.f32 %v1181
    %vm1188 = vweird.f32 %v1182
    %vm1189 = vmor %vm1187, %vm1188
    %v1190 = vsel %vm1189, %v1182, %v1186
    %v1191 = vand.u32 2147483647, %v1181
    %vm1192 = vcmp.eq.f32.partialorder %v1191, 8.507059e+37
    %v1193 = vand.u32 %v1181, 2147483648
    %v1194 = vor.u32 1.1754944e-38, %v1193
    %v1195 = vsel %vm1192, %v1194, %v1190
    %v1196 = vmul.f32 1.0, %v1195
    %v1197 = vadd.f32 %v1115, %v1155
    %v1198 = vxor.u32 %v1197, 2147483648
    %v1199 = vmul.f32 %v1198, 1.442695
    %v1200 = vpow.pop %v1199
    %v1201 = vadd.f32 %v1200, 1.0
    %v1202 = vrcp.pop %v1201
    %v1203 = vmul.f32 %v1201, %v1202
    %v1204 = vsub.f32 1.0, %v1203
    %v1205 = vmul.f32 %v1202, %v1204
    %v1206 = vadd.f32 %v1202, %v1205
    %vm1207 = vweird.f32 %v1201
    %vm1208 = vweird.f32 %v1202
    %vm1209 = vmor %vm1207, %vm1208
    %v1210 = vsel %vm1209, %v1202, %v1206
    %v1211 = vand.u32 2147483647, %v1201
    %vm1212 = vcmp.eq.f32.partialorder %v1211, 8.507059e+37
    %v1213 = vand.u32 %v1201, 2147483648
    %v1214 = vor.u32 1.1754944e-38, %v1213
    %v1215 = vsel %vm1212, %v1214, %v1210
    %v1216 = vmul.f32 1.0, %v1215
    %v1217 = vadd.f32 %v1175, %v328
    %v1218 = vmul.f32 %v1196, %v1217
    %v1219 = vadd.f32 %v1116, %v1218
    %v1220 = vtanh.pop %v1219
    %v1221 = vsub.f32 1.0, %v1216
    %v1222 = vmul.f32 %v1221, %v1220
    %v1223 = vmul.f32 %v1216, %v1112
    %v1224 = vadd.f32 %v1222, %v1223
    %1225 = vst [vmem:[#allocation3 + $0x38] sm:$0xff] %v1224
    %v1226 = vld [vmem:[#allocation3] sm:$0xff]
    %v1227 = vld [vmem:[#allocation3 + $0x8] sm:$0xff]
    %v1228 = vld [vmem:[#allocation3 + $0x10] sm:$0xff]
    %v1229 = vld [vmem:[#allocation3 + $0x18] sm:$0xff]
    %v1230 = vld [vmem:[#allocation3 + $0x20] sm:$0xff]
    %v1231 = vld [vmem:[#allocation3 + $0x28] sm:$0xff]
    %v1232 = vld [vmem:[#allocation3 + $0x30] sm:$0xff]
    %v1233 = vld [vmem:[#allocation3 + $0x38] sm:$0xff]
    %v1234 = vld [vmem:[%s7] sm:$0x1]
    %v1236 = vperm.slane %v1234, 0
    %v1238 = vmul.f32 %v1226, %v1236
    %v1239 = vmul.f32 %v1227, %v1236
    %v1240 = vmul.f32 %v1228, %v1236
    %v1241 = vmul.f32 %v1229, %v1236
    %v1242 = vmul.f32 %v1230, %v1236
    %v1243 = vmul.f32 %v1231, %v1236
    %v1244 = vmul.f32 %v1232, %v1236
    %v1245 = vmul.f32 %v1233, %v1236
    %1246 = vadd.xlane.f32.xlu0 %v1238
    %v1247 = vpop.xlane.xlu0 %1246
    %1248 = vadd.xlane.f32.xlu0 %v1239
    %v1249 = vpop.xlane.xlu0 %1248
    %1250 = vadd.xlane.f32.xlu0 %v1240
    %v1251 = vpop.xlane.xlu0 %1250
    %1252 = vadd.xlane.f32.xlu0 %v1241
    %v1253 = vpop.xlane.xlu0 %1252
    %1254 = vadd.xlane.f32.xlu0 %v1242
    %v1255 = vpop.xlane.xlu0 %1254
    %1256 = vadd.xlane.f32.xlu0 %v1243
    %v1257 = vpop.xlane.xlu0 %1256
    %1258 = vadd.xlane.f32.xlu0 %v1244
    %v1259 = vpop.xlane.xlu0 %1258
    %1260 = vadd.xlane.f32.xlu0 %v1245
    %v1261 = vpop.xlane.xlu0 %1260
    %v1262 = vld [vmem:[#allocation4] sm:$0x1]
    %v1264 = vperm.slane %v1262, 0
    %v1266 = vadd.f32 %v1247, %v1264
    %v1267 = vadd.f32 %v1249, %v1264
    %v1268 = vadd.f32 %v1251, %v1264
    %v1269 = vadd.f32 %v1253, %v1264
    %v1270 = vadd.f32 %v1255, %v1264
    %v1271 = vadd.f32 %v1257, %v1264
    %v1272 = vadd.f32 %v1259, %v1264
    %v1273 = vadd.f32 %v1261, %v1264
    %v1274 = vld [vmem:[%s1] sm:$0xff]
    %v1275 = vld [vmem:[%s1 + $0x8] sm:$0xff]
    %v1276 = vld [vmem:[%s1 + $0x10] sm:$0xff]
    %v1277 = vld [vmem:[%s1 + $0x18] sm:$0xff]
    %v1278 = vld [vmem:[%s1 + $0x20] sm:$0xff]
    %v1279 = vld [vmem:[%s1 + $0x28] sm:$0xff]
    %v1280 = vld [vmem:[%s1 + $0x30] sm:$0xff]
    %v1281 = vld [vmem:[%s1 + $0x38] sm:$0xff]
    %v1282 = vsub.f32 %v1266, %v1274
    %v1283 = vsub.f32 %v1267, %v1275
    %v1284 = vsub.f32 %v1268, %v1276
    %v1285 = vsub.f32 %v1269, %v1277
    %v1286 = vsub.f32 %v1270, %v1278
    %v1287 = vsub.f32 %v1271, %v1279
    %v1288 = vsub.f32 %v1272, %v1280
    %v1289 = vsub.f32 %v1273, %v1281
    %v1290 = vld [vmem:[%s2] sm:$0xff]
    %v1291 = vld [vmem:[%s2 + $0x8] sm:$0xff]
    %v1292 = vld [vmem:[%s2 + $0x10] sm:$0xff]
    %v1293 = vld [vmem:[%s2 + $0x18] sm:$0xff]
    %v1294 = vld [vmem:[%s2 + $0x20] sm:$0xff]
    %v1295 = vld [vmem:[%s2 + $0x28] sm:$0xff]
    %v1296 = vld [vmem:[%s2 + $0x30] sm:$0xff]
    %v1297 = vld [vmem:[%s2 + $0x38] sm:$0xff]
    %v1298 = vmul.f32 %v1282, %v1290
    %v1299 = vmul.f32 %v1283, %v1291
    %v1300 = vmul.f32 %v1284, %v1292
    %v1301 = vmul.f32 %v1285, %v1293
    %v1302 = vmul.f32 %v1286, %v1294
    %v1303 = vmul.f32 %v1287, %v1295
    %v1304 = vmul.f32 %v1288, %v1296
    %v1305 = vmul.f32 %v1289, %v1297
    %v1306 = vmul.f32 %v1298, %v1298
    %v1307 = vmul.f32 %v1299, %v1299
    %v1308 = vmul.f32 %v1300, %v1300
    %v1309 = vmul.f32 %v1301, %v1301
    %v1310 = vmul.f32 %v1302, %v1302
    %v1311 = vmul.f32 %v1303, %v1303
    %v1312 = vmul.f32 %v1304, %v1304
    %v1313 = vmul.f32 %v1305, %v1305
    %vm1314 = vcmask 7168
    %v1315 = vsel %vm1314, %v1306, 0.0
    %v1316 = vsel %vm1314, %v1307, 0.0
    %v1317 = vadd.f32 %v1315, %v1316
    %v1318 = vsel %vm1314, %v1308, 0.0
    %v1319 = vadd.f32 %v1317, %v1318
    %v1320 = vsel %vm1314, %v1309, 0.0
    %v1321 = vadd.f32 %v1319, %v1320
    %v1322 = vsel %vm1314, %v1310, 0.0
    %v1323 = vadd.f32 %v1321, %v1322
    %v1324 = vsel %vm1314, %v1311, 0.0
    %v1325 = vadd.f32 %v1323, %v1324
    %v1326 = vsel %vm1314, %v1312, 0.0
    %v1327 = vadd.f32 %v1325, %v1326
    %v1328 = vsel %vm1314, %v1313, 0.0
    %v1329 = vadd.f32 %v1327, %v1328
    %1330 = vadd.xlane.f32.xlu0 %v1329
    %v1331 = vpop.xlane.xlu0 %1330
    %v1332 = vrot.slane %v1331, 4
    %v1333 = vadd.f32 %v1331, %v1332
    %v1334 = vrot.slane %v1333, 2
    %v1335 = vadd.f32 %v1333, %v1334
    %v1336 = vrot.slane %v1335, 1
    %v1337 = vadd.f32 %v1335, %v1336
    %s1338 = vtos %v1337
    %v1339 = vrcp.pop 16.0
    %v1340 = vmul.f32 16.0, %v1339
    %v1341 = vsub.f32 1.0, %v1340
    %v1342 = vmul.f32 %v1339, %v1341
    %v1343 = vadd.f32 %v1339, %v1342
    %vm1344 = vweird.f32 %v1339
    %v1345 = vsel %vm1344, %v1339, %v1343
    %s1346 = vtos %v1345
    %s1347 = smul.f32 %s1338, %s1346
    %s1348 = scalar_lea.smem [#allocation10], 0
    %1349 = sst [smem:[%s1348]] %s1347
    // Predicated region
    $region46: #{count_model_loss.1} parent=1 // pred_check
      _
    $region47: #{count_model_loss.1} parent=1 // pred_check_branch
      %1351 = sbr.rel (0) target = $region49
    $region48: #{count_model_loss.1} parent=1 // pred_region
      %1353 = vsyncadd [#allocation7], 0
      %s1355 = sshll.u32 %s9, 4
      %s1356 = int_to_ptr.hbm [resolvable:$true] %s1355
      %1358 = dma.smem_to_hbm [#allocation10], 16, %s1356, [#allocation7]
    $region49: #{count_model_loss.1} parent=1 // pred_fallthru
      _
    // Predicated region
    $region50: #{count_model_loss.1} parent=1 // pred_check
      _
    $region51: #{count_model_loss.1} parent=1 // pred_check_branch
      %1360 = sbr.rel (0) target = $region53
    $region52: #{count_model_loss.1} parent=1 // pred_region
      %1362 = dma.done [#allocation7], 16
    $region53: #{count_model_loss.1} parent=1 // pred_fallthru
      _
    %1363 = sfence
    %1364 = vsyncpa [#allocation6], 1
    %1365 = vsyncpa [#allocation9], 1
    %1366 = vsyncpa [#allocation7], 1

</llo_original>
